<compile_context>
chip_gen: v7x
topology: tpu7x:2x2x1
jax: 0.10.0
libtpu: 0.0.40
codegen_flags: <defaults>
</compile_context>

<pallas_src>
import jax
import jax.numpy as jnp
from jax.experimental import pallas as pl
from jax.experimental.pallas import tpu as pltpu


def _raman_kernel(x_ref, p_ref, o_ref):
    x = x_ref[...]                     # (1, L_pad) broadcast row (f32)
    p = p_ref[...]                     # (T, 8) stacked per-pixel parameters

    a0 = p[:, 0:1]
    c0 = p[:, 1:2]
    s0 = p[:, 2:3]
    a1 = p[:, 3:4]
    c1 = p[:, 4:5]
    s1 = p[:, 5:6]
    sl = p[:, 6:7]
    cst = p[:, 7:8]

    # Per-row (T,1) precomputes: Lorentzian rewrite
    #   A / (((x-c)/s)^2 + 1)  ==  (A*s^2) / ((x-c)^2 + s^2)
    # hoists all per-row work off the per-element path.
    s0sq = s0 * s0
    s1sq = s1 * s1
    num0 = a0 * s0sq
    num1 = a1 * s1sq

    d0 = x - c0                        # (T, L_pad)
    d1 = x - c1
    pk0 = num0 / (d0 * d0 + s0sq)      # exact divide for parity with torch
    pk1 = num1 / (d1 * d1 + s1sq)

    o_ref[...] = (cst + sl * x + pk0 + pk1).astype(o_ref.dtype)


def _choose_tile_rows(hw, l_pad, out_bytes, *, target_tile_bytes=2 << 20,
                      max_tile_rows=4096):
    """Largest 8-multiple tile_rows whose output tile is ~target_tile_bytes
    (double-buffered well under the scoped-VMEM limit), shrunk so the grid
    stays >= 2 when possible (2-TC sharding on v7x / megacore)."""
    rows_budget = max(8, target_tile_bytes // max(1, l_pad * out_bytes))
    tile = min(max_tile_rows, rows_budget, max(8, hw))
    tile = max(8, (tile // 8) * 8)
    if hw > 8:
        while tile > 8 and pl.cdiv(hw, tile) < 2:
            tile = max(8, ((tile // 2) // 8) * 8)
    return tile


_PARAM_ORDER = ("peak_0_amplitudes", "peak_0_centers", "peak_0_sigmas",
                "peak_1_amplitudes", "peak_1_centers", "peak_1_sigmas",
                "slopes", "constants")


def raman_two_peaks(x, params, *, height, width, tile_rows=None,
                    out_dtype=jnp.float32):
    """x: (L,) x-coordinates; params: dict of 8 arrays, each (H, W, 1).

    Returns (H, W, L) in `out_dtype` (default f32; bf16 halves write traffic)."""
    L = x.shape[0]
    HW = height * width
    L_pad = pl.cdiv(L, 128) * 128          # lane-dense output stores
    out_bytes = jnp.dtype(out_dtype).itemsize

    # x as a single (1, L_pad) row; zero-padded lanes compute finite garbage
    # that is sliced off below.
    x2d = jnp.zeros((1, L_pad), jnp.float32).at[0, :L].set(x.astype(jnp.float32))

    # One stacked (HW, 8) parameter block -> one small DMA per grid step.
    pstack = jnp.stack(
        [params[k].reshape(HW).astype(jnp.float32) for k in _PARAM_ORDER],
        axis=1)

    if tile_rows is None:
        tile_rows = _choose_tile_rows(HW, L_pad, out_bytes)
    else:
        tile_rows = max(8, (tile_rows // 8) * 8)

    grid_len = pl.cdiv(HW, tile_rows)
    HW_pad = grid_len * tile_rows
    if HW_pad != HW:
        # Pad rows with 1.0 (keeps padded-row math finite); discarded after.
        pstack = jnp.pad(pstack, ((0, HW_pad - HW), (0, 0)),
                         constant_values=1.0)

    x_spec = pl.BlockSpec((1, L_pad), lambda i: (0, 0))
    p_spec = pl.BlockSpec((tile_rows, 8), lambda i: (i, 0))
    o_spec = pl.BlockSpec((tile_rows, L_pad), lambda i: (i, 0))

    out = pl.pallas_call(
        _raman_kernel,
        out_shape=jax.ShapeDtypeStruct((HW_pad, L_pad), out_dtype),
        grid_spec=pltpu.PrefetchScalarGridSpec(
            num_scalar_prefetch=0,
            grid=(grid_len,),
            in_specs=[x_spec, p_spec],
            out_specs=o_spec,
        ),
        compiler_params=pltpu.CompilerParams(
            dimension_semantics=("parallel",),
            vmem_limit_bytes=32 << 20,     # safe on v5e/v6e (128 MiB) and v7x (64 MiB)
        ),
    )(x2d, pstack)

    return out[:HW, :L].reshape(height, width, L)


def raman_two_peaks_ref(x, params):
    """Pure-JAX reference mirroring the PyTorch forward (exact divides)."""
    lp = lambda t: 1.0 / (t ** 2 + 1.0)
    p = params
    return (p["constants"] + p["slopes"] * x
            + p["peak_0_amplitudes"] * lp((x - p["peak_0_centers"]) / p["peak_0_sigmas"])
            + p["peak_1_amplitudes"] * lp((x - p["peak_1_centers"]) / p["peak_1_sigmas"]))


if __name__ == "__main__":
    # Small shapes consistent with the module; deliberately NOT multiples of the
    # tile sizes to exercise the row- and lane-padding paths.
    H, W, L = 24, 20, 200   # height, width, x_coordinates_len

    guesses = {
        "peak_0_amplitudes": 1.0,
        "peak_0_centers": 0.3,
        "peak_0_sigmas": 0.1,
        "peak_1_amplitudes": 0.5,
        "peak_1_centers": -0.4,
        "peak_1_sigmas": 0.2,
        "slopes": 0.01,
        "constants": 0.05,
    }

    key = jax.random.PRNGKey(0)
    keys = jax.random.split(key, len(guesses) + 1)

    # Per-pixel perturbation of the guesses so rows actually differ
    # (sigmas kept strictly positive).
    params = {}
    for kname, kk in zip(sorted(guesses), keys[:-1]):
        noise = jax.random.uniform(kk, (H, W, 1), dtype=jnp.float32,
                                   minval=-0.02, maxval=0.02)
        base = jnp.full((H, W, 1), guesses[kname], dtype=jnp.float32)
        params[kname] = base + noise

    x = jax.random.uniform(keys[-1], (L,), dtype=jnp.float32,
                           minval=-1.0, maxval=1.0)

    out = raman_two_peaks(x, params, height=H, width=W)
    out = jax.block_until_ready(out)

    ref = raman_two_peaks_ref(x, params)
    assert out.shape == (H, W, L)
    assert jnp.allclose(out, ref, atol=1e-5, rtol=1e-5)

    print("KERNEL_OK")
</pallas_src>

<mosaic_0001>
module attributes {stable_mosaic.version = 11 : i64} {
  func.func @_raman_kernel(%arg0: i32, %arg1: memref<1x256xf32, #tpu.memory_space<vmem>>, %arg2: memref<240x8xf32, #tpu.memory_space<vmem>>, %arg3: memref<240x256xf32, #tpu.memory_space<vmem>>) attributes {dimension_semantics = [#tpu.dimension_semantics<parallel>], iteration_bounds = array<i64: 2>, scalar_prefetch = 0 : i64, scratch_operands = 0 : i64, tpu.core_type = #tpu.core_type<tc>, window_params = [{pipeline_mode = #tpu.pipeline_mode<synchronous>, transform_indices = @transform_0, window_bounds = array<i64: 1, 256>}, {transform_indices = @transform_1, window_bounds = array<i64: 240, 8>}, {transform_indices = @transform_2, window_bounds = array<i64: 240, 256>}]} {
    %c0 = arith.constant 0 : index
    %c0_0 = arith.constant 0 : index
    %0 = vector.load %arg1[%c0, %c0_0] : memref<1x256xf32, #tpu.memory_space<vmem>>, vector<1x256xf32>
    %c0_1 = arith.constant 0 : index
    %c0_2 = arith.constant 0 : index
    %1 = vector.load %arg2[%c0_1, %c0_2] : memref<240x8xf32, #tpu.memory_space<vmem>>, vector<240x8xf32>
    %2 = vector.extract_strided_slice %1 {offsets = [0, 0], sizes = [240, 1], strides = [1, 1]} : vector<240x8xf32> to vector<240x1xf32>
    %3 = vector.extract_strided_slice %1 {offsets = [0, 1], sizes = [240, 1], strides = [1, 1]} : vector<240x8xf32> to vector<240x1xf32>
    %4 = vector.extract_strided_slice %1 {offsets = [0, 2], sizes = [240, 1], strides = [1, 1]} : vector<240x8xf32> to vector<240x1xf32>
    %5 = vector.extract_strided_slice %1 {offsets = [0, 3], sizes = [240, 1], strides = [1, 1]} : vector<240x8xf32> to vector<240x1xf32>
    %6 = vector.extract_strided_slice %1 {offsets = [0, 4], sizes = [240, 1], strides = [1, 1]} : vector<240x8xf32> to vector<240x1xf32>
    %7 = vector.extract_strided_slice %1 {offsets = [0, 5], sizes = [240, 1], strides = [1, 1]} : vector<240x8xf32> to vector<240x1xf32>
    %8 = vector.extract_strided_slice %1 {offsets = [0, 6], sizes = [240, 1], strides = [1, 1]} : vector<240x8xf32> to vector<240x1xf32>
    %9 = vector.extract_strided_slice %1 {offsets = [0, 7], sizes = [240, 1], strides = [1, 1]} : vector<240x8xf32> to vector<240x1xf32>
    %10 = arith.mulf %4, %4 : vector<240x1xf32>
    %11 = arith.mulf %7, %7 : vector<240x1xf32>
    %12 = arith.mulf %2, %10 : vector<240x1xf32>
    %13 = arith.mulf %5, %11 : vector<240x1xf32>
    %14 = vector.broadcast %0 : vector<1x256xf32> to vector<240x256xf32>
    %15 = vector.broadcast %3 : vector<240x1xf32> to vector<240x256xf32>
    %16 = arith.subf %14, %15 : vector<240x256xf32>
    %17 = vector.broadcast %0 : vector<1x256xf32> to vector<240x256xf32>
    %18 = vector.broadcast %6 : vector<240x1xf32> to vector<240x256xf32>
    %19 = arith.subf %17, %18 : vector<240x256xf32>
    %20 = arith.mulf %16, %16 : vector<240x256xf32>
    %21 = vector.broadcast %10 : vector<240x1xf32> to vector<240x256xf32>
    %22 = arith.addf %20, %21 : vector<240x256xf32>
    %23 = vector.broadcast %12 : vector<240x1xf32> to vector<240x256xf32>
    %24 = arith.divf %23, %22 : vector<240x256xf32>
    %25 = arith.mulf %19, %19 : vector<240x256xf32>
    %26 = vector.broadcast %11 : vector<240x1xf32> to vector<240x256xf32>
    %27 = arith.addf %25, %26 : vector<240x256xf32>
    %28 = vector.broadcast %13 : vector<240x1xf32> to vector<240x256xf32>
    %29 = arith.divf %28, %27 : vector<240x256xf32>
    %30 = vector.broadcast %8 : vector<240x1xf32> to vector<240x256xf32>
    %31 = vector.broadcast %0 : vector<1x256xf32> to vector<240x256xf32>
    %32 = arith.mulf %30, %31 : vector<240x256xf32>
    %33 = vector.broadcast %9 : vector<240x1xf32> to vector<240x256xf32>
    %34 = arith.addf %33, %32 : vector<240x256xf32>
    %35 = arith.addf %34, %24 : vector<240x256xf32>
    %36 = arith.addf %35, %29 : vector<240x256xf32>
    %c0_3 = arith.constant 0 : index
    %c0_4 = arith.constant 0 : index
    %37 = vector.load %arg3[%c0_3, %c0_4] : memref<240x256xf32, #tpu.memory_space<vmem>>, vector<240x256xf32>
    tpu.vector_store %arg3[%c0_3, %c0_4], %36 {strides = array<i32>} : memref<240x256xf32, #tpu.memory_space<vmem>>, vector<240x256xf32>,
    return
  }
  func.func @transform_0(%arg0: i32) -> (i32, i32) {
    %c0_i32 = arith.constant 0 : i32
    %c0_i32_0 = arith.constant 0 : i32
    %c0_i32_1 = arith.constant 0 : i32
    return %c0_i32, %c0_i32_0 : i32, i32
  }
  func.func @transform_1(%arg0: i32) -> (i32, i32) {
    %c0_i32 = arith.constant 0 : i32
    %c0_i32_0 = arith.constant 0 : i32
    return %arg0, %c0_i32 : i32, i32
  }
  func.func @transform_2(%arg0: i32) -> (i32, i32) {
    %c0_i32 = arith.constant 0 : i32
    %c0_i32_0 = arith.constant 0 : i32
    return %arg0, %c0_i32 : i32, i32
  }
}

</mosaic_0001>

<llo_original>
// kernel: tpu_custom_call.1
$region0: #{tpu_custom_call.1}
  #allocation0 [shape = 'u32[]', space=smem, size = 0x4, offset = 0x4, fixed_abs, tag = 'smem constant byte address 0x4 - core index']
  #allocation1 [shape = 'u32[144,128]{1,0:T(1,128)}', space=vmem, size = 0x12000, scoped, tag = 'internal scratch']
  %s0 = inlined_call_operand.vmem [shape: f32[1,256], index: 0, kind: input, shape index: {}]
  %s1 = inlined_call_operand.vmem [shape: f32[480,8], index: 1, kind: input, shape index: {}]
  %s2 = inlined_call_operand.hbm [shape: f32[480,256], index: 2, kind: output, shape index: {}]
  %s3 = sld [smem:[#allocation0]]
  $region41: #{tpu_custom_call.1} parent=0
    _
  %s5 = ssub.s32 1, %s3
  %s6 = scalar_select 0, %s5, %s3
  $region1: #{tpu_custom_call.1} parent=0
    #allocation2 [shape = 'u8[491520]{0}', space=vmem, size = 0x78000, scoped, tag = 'output window, operand 0']
    #allocation3 [shape = 's32[2]{0}', space=sflag, size = 0x8, scoped, tag = 'scoped memory for tpu_custom_call.1']
    %7 = vsyncpa [#allocation3], 0
    %s8 = scalar_lea.sflag [#allocation3], 1
    %9 = vsyncpa %s8, 0
    loop: start=0, step=1, limit=4
    $region2: #{tpu_custom_call.1} parent=1 // loop_pre_header
      _
    $region3: #{tpu_custom_call.1} parent=1 // loop_header
      %s11 = sphi 0, %s15
      %p12 = scmp.ge.s32.totalorder %s11, 4
      %s19 = sphi 0, %s19
      %s21 = sphi 0, %s19
      %s22 = sphi 0, %s21
      %s36 = sphi 0, %s22
      %s42 = sphi 0, %s44
      %s45 = sphi 0, %s42
      %s46 = sphi 0, %s45
      %s62 = sphi 0, %s46
      %s68 = sphi 0, %s70
      %s71 = sphi 0, %s68
      %s72 = sphi 0, %s71
      %s88 = sphi 0, %s72
    $region4: #{tpu_custom_call.1} parent=1 // loop_header_branch
      %14 = sbr.rel (%p12) target = $region8
    $region5: #{tpu_custom_call.1} parent=1 // loop_body
      %s16 = ssub.s32 %s11, 1
      %s17 = ssub.s32 %s11, 2
      %s18 = sadd.s32 %s11, 1
      %s20 = sadd.s32 %s19, 1
      %p23 = scmp.eq.s32.totalorder %s11, 1
      %p24 = scmp.ne.s32.totalorder %s19, %s21
      %p25 = scmp.eq.s32.totalorder %s11, 0
      %p26 = por %p24, %p25
      %p27 = scmp.ne.s32.totalorder %s19, %s21
      %p28 = scmp.eq.s32.totalorder %s16, 1
      %p29 = por %p27, %p28
      %p30 = scmp.ne.s32.totalorder %s21, %s22
      %p31 = scmp.eq.s32.totalorder %s16, 0
      %p32 = por %p30, %p31
      %p33 = scmp.ne.s32.totalorder %s21, %s22
      %p34 = scmp.eq.s32.totalorder %s17, 1
      %p35 = por %p33, %p34
      %p37 = scmp.ne.s32.totalorder %s22, %s36
      %p38 = scmp.eq.s32.totalorder %s17, 0
      %p39 = por %p37, %p38
      %s40 = ssub.s32 %s11, %s18
      %p41 = scmp.eq.s32.totalorder %s40, 0
      %s43 = sadd.s32 %s42, 1
      %s44 = scalar_select %p41, %s42, %s43
      %p47 = pneg %p41
      %p48 = scmp.eq.s32.totalorder %s11, 1
      %p49 = por %p47, %p48
      %p50 = scmp.ne.s32.totalorder %s42, %s45
      %p51 = scmp.eq.s32.totalorder %s11, 0
      %p52 = por %p50, %p51
      %p53 = scmp.ne.s32.totalorder %s42, %s45
      %p54 = scmp.eq.s32.totalorder %s16, 1
      %p55 = por %p53, %p54
      %p56 = scmp.ne.s32.totalorder %s45, %s46
      %p57 = scmp.eq.s32.totalorder %s16, 0
      %p58 = por %p56, %p57
      %p59 = scmp.ne.s32.totalorder %s45, %s46
      %p60 = scmp.eq.s32.totalorder %s17, 1
      %p61 = por %p59, %p60
      %p63 = scmp.ne.s32.totalorder %s46, %s62
      %p64 = scmp.eq.s32.totalorder %s17, 0
      %p65 = por %p63, %p64
      %s66 = ssub.s32 %s11, %s18
      %p67 = scmp.eq.s32.totalorder %s66, 0
      %s69 = sadd.s32 %s68, 1
      %s70 = scalar_select %p67, %s68, %s69
      %p73 = pneg %p67
      %p74 = scmp.eq.s32.totalorder %s11, 1
      %p75 = por %p73, %p74
      %p76 = scmp.ne.s32.totalorder %s68, %s71
      %p77 = scmp.eq.s32.totalorder %s11, 0
      %p78 = por %p76, %p77
      %p79 = scmp.ne.s32.totalorder %s68, %s71
      %p80 = scmp.eq.s32.totalorder %s16, 1
      %p81 = por %p79, %p80
      %p82 = scmp.ne.s32.totalorder %s71, %s72
      %p83 = scmp.eq.s32.totalorder %s16, 0
      %p84 = por %p82, %p83
      %p85 = scmp.ne.s32.totalorder %s71, %s72
      %p86 = scmp.eq.s32.totalorder %s17, 1
      %p87 = por %p85, %p86
      %p89 = scmp.ne.s32.totalorder %s72, %s88
      %p90 = scmp.eq.s32.totalorder %s17, 0
      %p91 = por %p89, %p90
      %p92 = scmp.le.s32.totalorder 1, %s11
      %p93 = scmp.lt.s32.totalorder %s11, 3
      %p94 = pnand %p92, %p93
      %p95 = pneg %p94
      // Predicated region
      $region9: #{tpu_custom_call.1} parent=5 // pred_check
        _
      $region10: #{tpu_custom_call.1} parent=5 // pred_check_branch
        %97 = sbr.rel (%p94) target = $region12
      $region11: #{tpu_custom_call.1} parent=5 // pred_region
        %s98 = ssub.s32 %s11, 1
        // Predicated region
        $region13: #{tpu_custom_call.1} parent=11 // pred_check
          %p99 = pneg %p32
        $region14: #{tpu_custom_call.1} parent=11 // pred_check_branch
          %101 = sbr.rel (%p99) target = $region16
        $region15: #{tpu_custom_call.1} parent=11 // pred_region
          _
        $region16: #{tpu_custom_call.1} parent=11 // pred_fallthru
          _
      $region12: #{tpu_custom_call.1} parent=5 // pred_fallthru
        _
      %p102 = scmp.lt.s32.totalorder %s11, 2
      // Predicated region
      $region17: #{tpu_custom_call.1} parent=5 // pred_check
        %p103 = pneg %p102
      $region18: #{tpu_custom_call.1} parent=5 // pred_check_branch
        %105 = sbr.rel (%p103) target = $region20
      $region19: #{tpu_custom_call.1} parent=5 // pred_region
        // Predicated region
        $region21: #{tpu_custom_call.1} parent=19 // pred_check
          %p106 = pneg %p52
        $region22: #{tpu_custom_call.1} parent=19 // pred_check_branch
          %108 = sbr.rel (%p106) target = $region24
        $region23: #{tpu_custom_call.1} parent=19 // pred_region
          %s109 = smul.u32 30, %s11
          %p110 = scmp.lt.s32.totalorder %s109, 59
          %s111 = scalar_select %p110, %s109, 59
          %s112 = smul.addr %s111, 8
          %s113 = scalar_lea.vmem %s1, %s112
          %s114 = smul.u32 30, %s11
        $region24: #{tpu_custom_call.1} parent=19 // pred_fallthru
          _
      $region20: #{tpu_custom_call.1} parent=5 // pred_fallthru
        _
      %p115 = scmp.le.s32.totalorder 1, %s11
      %p116 = scmp.lt.s32.totalorder %s11, 3
      %p117 = pnand %p115, %p116
      %p118 = pneg %p117
      // Predicated region
      $region25: #{tpu_custom_call.1} parent=5 // pred_check
        _
      $region26: #{tpu_custom_call.1} parent=5 // pred_check_branch
        %120 = sbr.rel (%p117) target = $region28
      $region27: #{tpu_custom_call.1} parent=5 // pred_region
        %s121 = ssub.s32 %s11, 1
        %p122 = pneg %p32
        %p123 = pneg %p29
        %s124 = smul.u32 30, %s16
        %p125 = scmp.lt.s32.totalorder %s124, 59
        %s126 = scalar_select %p125, %s124, 59
        %s127 = smul.addr %s126, 8
        %s128 = scalar_lea.vmem %s1, %s127
        %p129 = pneg %p58
        %p130 = pneg %p55
        %p131 = pneg %p84
        %p132 = pneg %p81
        %s133 = sand.u32 %s71, 1
        %s134 = scalar_lea.sflag [#allocation3], %s133
        %s135 = sand.u32 %s71, 1
        %s136 = smul.addr %s135, 480
        %s137 = scalar_lea.vmem [#allocation2], %s136
        %s138 = smul.u32 30, %s16
        %p139 = scmp.lt.s32.totalorder %s138, 59
        %s140 = scalar_select %p139, %s138, 59
        %s141 = smul.addr %s140, 8
        %s142 = scalar_lea.vmem %s1, %s141
        %s143 = smul.u32 30, %s16
        %s144 = smul.u32 30, %s16
        %v145 = vld [vmem:[%s0] sm:$0x3]
        %v146 = vld [vmem:[%s142] sm:$0xff]
        %v147 = vld [vmem:[%s142 + $0x8] sm:$0xff]
        %v148 = vld [vmem:[%s142 + $0x10] sm:$0xff]
        %v149 = vld [vmem:[%s142 + $0x18] sm:$0xff]
        %v150 = vld [vmem:[%s142 + $0x20] sm:$0xff]
        %v151 = vld [vmem:[%s142 + $0x28] sm:$0xff]
        %v152 = vld [vmem:[%s142 + $0x30] sm:$0xff]
        %v153 = vld [vmem:[%s142 + $0x38] sm:$0xff]
        %v154 = vld [vmem:[%s142 + $0x40] sm:$0xff]
        %v155 = vld [vmem:[%s142 + $0x48] sm:$0xff]
        %v156 = vld [vmem:[%s142 + $0x50] sm:$0xff]
        %v157 = vld [vmem:[%s142 + $0x58] sm:$0xff]
        %v158 = vld [vmem:[%s142 + $0x60] sm:$0xff]
        %v159 = vld [vmem:[%s142 + $0x68] sm:$0xff]
        %v160 = vld [vmem:[%s142 + $0x70] sm:$0xff]
        %v161 = vld [vmem:[%s142 + $0x78] sm:$0xff]
        %v162 = vld [vmem:[%s142 + $0x80] sm:$0xff]
        %v163 = vld [vmem:[%s142 + $0x88] sm:$0xff]
        %v164 = vld [vmem:[%s142 + $0x90] sm:$0xff]
        %v165 = vld [vmem:[%s142 + $0x98] sm:$0xff]
        %v166 = vld [vmem:[%s142 + $0xa0] sm:$0xff]
        %v167 = vld [vmem:[%s142 + $0xa8] sm:$0xff]
        %v168 = vld [vmem:[%s142 + $0xb0] sm:$0xff]
        %v169 = vld [vmem:[%s142 + $0xb8] sm:$0xff]
        %v170 = vld [vmem:[%s142 + $0xc0] sm:$0xff]
        %v171 = vld [vmem:[%s142 + $0xc8] sm:$0xff]
        %v172 = vld [vmem:[%s142 + $0xd0] sm:$0xff]
        %v173 = vld [vmem:[%s142 + $0xd8] sm:$0xff]
        %v174 = vld [vmem:[%s142 + $0xe0] sm:$0xff]
        %v175 = vld [vmem:[%s142 + $0xe8] sm:$0xff]
        %v176 = vmul.f32 %v146, %v146
        %v177 = vmul.f32 %v147, %v147
        %v178 = vmul.f32 %v148, %v148
        %v179 = vmul.f32 %v149, %v149
        %v180 = vmul.f32 %v150, %v150
        %v181 = vmul.f32 %v151, %v151
        %v182 = vmul.f32 %v152, %v152
        %v183 = vmul.f32 %v153, %v153
        %v184 = vmul.f32 %v154, %v154
        %v185 = vmul.f32 %v155, %v155
        %v186 = vmul.f32 %v156, %v156
        %v187 = vmul.f32 %v157, %v157
        %v188 = vmul.f32 %v158, %v158
        %v189 = vmul.f32 %v159, %v159
        %v190 = vmul.f32 %v160, %v160
        %v191 = vmul.f32 %v161, %v161
        %v192 = vmul.f32 %v162, %v162
        %v193 = vmul.f32 %v163, %v163
        %v194 = vmul.f32 %v164, %v164
        %v195 = vmul.f32 %v165, %v165
        %v196 = vmul.f32 %v166, %v166
        %v197 = vmul.f32 %v167, %v167
        %v198 = vmul.f32 %v168, %v168
        %v199 = vmul.f32 %v169, %v169
        %v200 = vmul.f32 %v170, %v170
        %v201 = vmul.f32 %v171, %v171
        %v202 = vmul.f32 %v172, %v172
        %v203 = vmul.f32 %v173, %v173
        %v204 = vmul.f32 %v174, %v174
        %v205 = vmul.f32 %v175, %v175
        %236 = vrot.lane.b32.xlu0 %v176, 126
        %v237 = vpop.permute.xlu0 %236
        %238 = vrot.lane.b32.xlu0 %v177, 126
        %v239 = vpop.permute.xlu0 %238
        %240 = vrot.lane.b32.xlu0 %v178, 126
        %v241 = vpop.permute.xlu0 %240
        %242 = vrot.lane.b32.xlu0 %v179, 126
        %v243 = vpop.permute.xlu0 %242
        %244 = vrot.lane.b32.xlu0 %v180, 126
        %v245 = vpop.permute.xlu0 %244
        %246 = vrot.lane.b32.xlu0 %v181, 126
        %v247 = vpop.permute.xlu0 %246
        %248 = vrot.lane.b32.xlu0 %v182, 126
        %v249 = vpop.permute.xlu0 %248
        %250 = vrot.lane.b32.xlu0 %v183, 126
        %v251 = vpop.permute.xlu0 %250
        %252 = vrot.lane.b32.xlu0 %v184, 126
        %v253 = vpop.permute.xlu0 %252
        %254 = vrot.lane.b32.xlu0 %v185, 126
        %v255 = vpop.permute.xlu0 %254
        %256 = vrot.lane.b32.xlu0 %v186, 126
        %v257 = vpop.permute.xlu0 %256
        %258 = vrot.lane.b32.xlu0 %v187, 126
        %v259 = vpop.permute.xlu0 %258
        %260 = vrot.lane.b32.xlu0 %v188, 126
        %v261 = vpop.permute.xlu0 %260
        %262 = vrot.lane.b32.xlu0 %v189, 126
        %v263 = vpop.permute.xlu0 %262
        %264 = vrot.lane.b32.xlu0 %v190, 126
        %v265 = vpop.permute.xlu0 %264
        %266 = vrot.lane.b32.xlu0 %v191, 126
        %v267 = vpop.permute.xlu0 %266
        %268 = vrot.lane.b32.xlu0 %v192, 126
        %v269 = vpop.permute.xlu0 %268
        %270 = vrot.lane.b32.xlu0 %v193, 126
        %v271 = vpop.permute.xlu0 %270
        %272 = vrot.lane.b32.xlu0 %v194, 126
        %v273 = vpop.permute.xlu0 %272
        %274 = vrot.lane.b32.xlu0 %v195, 126
        %v275 = vpop.permute.xlu0 %274
        %276 = vrot.lane.b32.xlu0 %v196, 126
        %v277 = vpop.permute.xlu0 %276
        %278 = vrot.lane.b32.xlu0 %v197, 126
        %v279 = vpop.permute.xlu0 %278
        %280 = vrot.lane.b32.xlu0 %v198, 126
        %v281 = vpop.permute.xlu0 %280
        %282 = vrot.lane.b32.xlu0 %v199, 126
        %v283 = vpop.permute.xlu0 %282
        %284 = vrot.lane.b32.xlu0 %v200, 126
        %v285 = vpop.permute.xlu0 %284
        %286 = vrot.lane.b32.xlu0 %v201, 126
        %v287 = vpop.permute.xlu0 %286
        %288 = vrot.lane.b32.xlu0 %v202, 126
        %v289 = vpop.permute.xlu0 %288
        %290 = vrot.lane.b32.xlu0 %v203, 126
        %v291 = vpop.permute.xlu0 %290
        %292 = vrot.lane.b32.xlu0 %v204, 126
        %v293 = vpop.permute.xlu0 %292
        %294 = vrot.lane.b32.xlu0 %v205, 126
        %v295 = vpop.permute.xlu0 %294
        %v326 = vmul.f32 %v146, %v237
        %v327 = vmul.f32 %v147, %v239
        %v328 = vmul.f32 %v148, %v241
        %v329 = vmul.f32 %v149, %v243
        %v330 = vmul.f32 %v150, %v245
        %v331 = vmul.f32 %v151, %v247
        %v332 = vmul.f32 %v152, %v249
        %v333 = vmul.f32 %v153, %v251
        %v334 = vmul.f32 %v154, %v253
        %v335 = vmul.f32 %v155, %v255
        %v336 = vmul.f32 %v156, %v257
        %v337 = vmul.f32 %v157, %v259
        %v338 = vmul.f32 %v158, %v261
        %v339 = vmul.f32 %v159, %v263
        %v340 = vmul.f32 %v160, %v265
        %v341 = vmul.f32 %v161, %v267
        %v342 = vmul.f32 %v162, %v269
        %v343 = vmul.f32 %v163, %v271
        %v344 = vmul.f32 %v164, %v273
        %v345 = vmul.f32 %v165, %v275
        %v346 = vmul.f32 %v166, %v277
        %v347 = vmul.f32 %v167, %v279
        %v348 = vmul.f32 %v168, %v281
        %v349 = vmul.f32 %v169, %v283
        %v350 = vmul.f32 %v170, %v285
        %v351 = vmul.f32 %v171, %v287
        %v352 = vmul.f32 %v172, %v289
        %v353 = vmul.f32 %v173, %v291
        %v354 = vmul.f32 %v174, %v293
        %v355 = vmul.f32 %v175, %v295
        %v357 = vlaneseq
        %v358 = vshrl.u32 %v357, 7
        %v359 = vsub.s32 0, %v358
        %v360 = vrot.slane %v145, %v359
        %v361 = vlaneseq
        %v362 = vshrl.u32 %v361, 7
        %v363 = vsub.s32 1, %v362
        %v364 = vrot.slane %v145, %v363
        %368 = vset.pattern.permute.xlu0 1
        %369 = vperm.xlu0 %368, %v146
        %v370 = vpop.permute.xlu0 %369
        %373 = vset.pattern.permute.xlu0 1
        %374 = vperm.xlu0 %373, %v147
        %v375 = vpop.permute.xlu0 %374
        %378 = vset.pattern.permute.xlu0 1
        %379 = vperm.xlu0 %378, %v148
        %v380 = vpop.permute.xlu0 %379
        %383 = vset.pattern.permute.xlu0 1
        %384 = vperm.xlu0 %383, %v149
        %v385 = vpop.permute.xlu0 %384
        %388 = vset.pattern.permute.xlu0 1
        %389 = vperm.xlu0 %388, %v150
        %v390 = vpop.permute.xlu0 %389
        %393 = vset.pattern.permute.xlu0 1
        %394 = vperm.xlu0 %393, %v151
        %v395 = vpop.permute.xlu0 %394
        %398 = vset.pattern.permute.xlu0 1
        %399 = vperm.xlu0 %398, %v152
        %v400 = vpop.permute.xlu0 %399
        %403 = vset.pattern.permute.xlu0 1
        %404 = vperm.xlu0 %403, %v153
        %v405 = vpop.permute.xlu0 %404
        %408 = vset.pattern.permute.xlu0 1
        %409 = vperm.xlu0 %408, %v154
        %v410 = vpop.permute.xlu0 %409
        %413 = vset.pattern.permute.xlu0 1
        %414 = vperm.xlu0 %413, %v155
        %v415 = vpop.permute.xlu0 %414
        %418 = vset.pattern.permute.xlu0 1
        %419 = vperm.xlu0 %418, %v156
        %v420 = vpop.permute.xlu0 %419
        %423 = vset.pattern.permute.xlu0 1
        %424 = vperm.xlu0 %423, %v157
        %v425 = vpop.permute.xlu0 %424
        %428 = vset.pattern.permute.xlu0 1
        %429 = vperm.xlu0 %428, %v158
        %v430 = vpop.permute.xlu0 %429
        %433 = vset.pattern.permute.xlu0 1
        %434 = vperm.xlu0 %433, %v159
        %v435 = vpop.permute.xlu0 %434
        %438 = vset.pattern.permute.xlu0 1
        %439 = vperm.xlu0 %438, %v160
        %v440 = vpop.permute.xlu0 %439
        %443 = vset.pattern.permute.xlu0 1
        %444 = vperm.xlu0 %443, %v161
        %v445 = vpop.permute.xlu0 %444
        %448 = vset.pattern.permute.xlu0 1
        %449 = vperm.xlu0 %448, %v162
        %v450 = vpop.permute.xlu0 %449
        %453 = vset.pattern.permute.xlu0 1
        %454 = vperm.xlu0 %453, %v163
        %v455 = vpop.permute.xlu0 %454
        %458 = vset.pattern.permute.xlu0 1
        %459 = vperm.xlu0 %458, %v164
        %v460 = vpop.permute.xlu0 %459
        %463 = vset.pattern.permute.xlu0 1
        %464 = vperm.xlu0 %463, %v165
        %v465 = vpop.permute.xlu0 %464
        %468 = vset.pattern.permute.xlu0 1
        %469 = vperm.xlu0 %468, %v166
        %v470 = vpop.permute.xlu0 %469
        %473 = vset.pattern.permute.xlu0 1
        %474 = vperm.xlu0 %473, %v167
        %v475 = vpop.permute.xlu0 %474
        %478 = vset.pattern.permute.xlu0 1
        %479 = vperm.xlu0 %478, %v168
        %v480 = vpop.permute.xlu0 %479
        %483 = vset.pattern.permute.xlu0 1
        %484 = vperm.xlu0 %483, %v169
        %v485 = vpop.permute.xlu0 %484
        %488 = vset.pattern.permute.xlu0 1
        %489 = vperm.xlu0 %488, %v170
        %v490 = vpop.permute.xlu0 %489
        %493 = vset.pattern.permute.xlu0 1
        %494 = vperm.xlu0 %493, %v171
        %v495 = vpop.permute.xlu0 %494
        %498 = vset.pattern.permute.xlu0 1
        %499 = vperm.xlu0 %498, %v172
        %v500 = vpop.permute.xlu0 %499
        %503 = vset.pattern.permute.xlu0 1
        %504 = vperm.xlu0 %503, %v173
        %v505 = vpop.permute.xlu0 %504
        %508 = vset.pattern.permute.xlu0 1
        %509 = vperm.xlu0 %508, %v174
        %v510 = vpop.permute.xlu0 %509
        %513 = vset.pattern.permute.xlu0 1
        %514 = vperm.xlu0 %513, %v175
        %v515 = vpop.permute.xlu0 %514
        %v517 = vsub.f32 %v360, %v370
        %v518 = vsub.f32 %v364, %v370
        %v519 = vsub.f32 %v360, %v375
        %v520 = vsub.f32 %v364, %v375
        %v521 = vsub.f32 %v360, %v380
        %v522 = vsub.f32 %v364, %v380
        %v523 = vsub.f32 %v360, %v385
        %v524 = vsub.f32 %v364, %v385
        %v525 = vsub.f32 %v360, %v390
        %v526 = vsub.f32 %v364, %v390
        %v527 = vsub.f32 %v360, %v395
        %v528 = vsub.f32 %v364, %v395
        %v529 = vsub.f32 %v360, %v400
        %v530 = vsub.f32 %v364, %v400
        %v531 = vsub.f32 %v360, %v405
        %v532 = vsub.f32 %v364, %v405
        %v533 = vsub.f32 %v360, %v410
        %v534 = vsub.f32 %v364, %v410
        %v535 = vsub.f32 %v360, %v415
        %v536 = vsub.f32 %v364, %v415
        %v537 = vsub.f32 %v360, %v420
        %v538 = vsub.f32 %v364, %v420
        %v539 = vsub.f32 %v360, %v425
        %v540 = vsub.f32 %v364, %v425
        %v541 = vsub.f32 %v360, %v430
        %v542 = vsub.f32 %v364, %v430
        %v543 = vsub.f32 %v360, %v435
        %v544 = vsub.f32 %v364, %v435
        %v545 = vsub.f32 %v360, %v440
        %v546 = vsub.f32 %v364, %v440
        %v547 = vsub.f32 %v360, %v445
        %v548 = vsub.f32 %v364, %v445
        %v549 = vsub.f32 %v360, %v450
        %v550 = vsub.f32 %v364, %v450
        %v551 = vsub.f32 %v360, %v455
        %v552 = vsub.f32 %v364, %v455
        %v553 = vsub.f32 %v360, %v460
        %v554 = vsub.f32 %v364, %v460
        %v555 = vsub.f32 %v360, %v465
        %v556 = vsub.f32 %v364, %v465
        %v557 = vsub.f32 %v360, %v470
        %v558 = vsub.f32 %v364, %v470
        %v559 = vsub.f32 %v360, %v475
        %v560 = vsub.f32 %v364, %v475
        %v561 = vsub.f32 %v360, %v480
        %v562 = vsub.f32 %v364, %v480
        %v563 = vsub.f32 %v360, %v485
        %v564 = vsub.f32 %v364, %v485
        %v565 = vsub.f32 %v360, %v490
        %v566 = vsub.f32 %v364, %v490
        %v567 = vsub.f32 %v360, %v495
        %v568 = vsub.f32 %v364, %v495
        %v569 = vsub.f32 %v360, %v500
        %v570 = vsub.f32 %v364, %v500
        %v571 = vsub.f32 %v360, %v505
        %v572 = vsub.f32 %v364, %v505
        %v573 = vsub.f32 %v360, %v510
        %v574 = vsub.f32 %v364, %v510
        %v575 = vsub.f32 %v360, %v515
        %v576 = vsub.f32 %v364, %v515
        %577 = vset.pattern.permute.xlu0 4
        %578 = vperm.xlu0 %577, %v146
        %v579 = vpop.permute.xlu0 %578
        %581 = vset.pattern.permute.xlu0 4
        %582 = vperm.xlu0 %581, %v147
        %v583 = vpop.permute.xlu0 %582
        %585 = vset.pattern.permute.xlu0 4
        %586 = vperm.xlu0 %585, %v148
        %v587 = vpop.permute.xlu0 %586
        %589 = vset.pattern.permute.xlu0 4
        %590 = vperm.xlu0 %589, %v149
        %v591 = vpop.permute.xlu0 %590
        %593 = vset.pattern.permute.xlu0 4
        %594 = vperm.xlu0 %593, %v150
        %v595 = vpop.permute.xlu0 %594
        %597 = vset.pattern.permute.xlu0 4
        %598 = vperm.xlu0 %597, %v151
        %v599 = vpop.permute.xlu0 %598
        %601 = vset.pattern.permute.xlu0 4
        %602 = vperm.xlu0 %601, %v152
        %v603 = vpop.permute.xlu0 %602
        %605 = vset.pattern.permute.xlu0 4
        %606 = vperm.xlu0 %605, %v153
        %v607 = vpop.permute.xlu0 %606
        %609 = vset.pattern.permute.xlu0 4
        %610 = vperm.xlu0 %609, %v154
        %v611 = vpop.permute.xlu0 %610
        %613 = vset.pattern.permute.xlu0 4
        %614 = vperm.xlu0 %613, %v155
        %v615 = vpop.permute.xlu0 %614
        %617 = vset.pattern.permute.xlu0 4
        %618 = vperm.xlu0 %617, %v156
        %v619 = vpop.permute.xlu0 %618
        %621 = vset.pattern.permute.xlu0 4
        %622 = vperm.xlu0 %621, %v157
        %v623 = vpop.permute.xlu0 %622
        %625 = vset.pattern.permute.xlu0 4
        %626 = vperm.xlu0 %625, %v158
        %v627 = vpop.permute.xlu0 %626
        %629 = vset.pattern.permute.xlu0 4
        %630 = vperm.xlu0 %629, %v159
        %v631 = vpop.permute.xlu0 %630
        %633 = vset.pattern.permute.xlu0 4
        %634 = vperm.xlu0 %633, %v160
        %v635 = vpop.permute.xlu0 %634
        %637 = vset.pattern.permute.xlu0 4
        %638 = vperm.xlu0 %637, %v161
        %v639 = vpop.permute.xlu0 %638
        %641 = vset.pattern.permute.xlu0 4
        %642 = vperm.xlu0 %641, %v162
        %v643 = vpop.permute.xlu0 %642
        %645 = vset.pattern.permute.xlu0 4
        %646 = vperm.xlu0 %645, %v163
        %v647 = vpop.permute.xlu0 %646
        %649 = vset.pattern.permute.xlu0 4
        %650 = vperm.xlu0 %649, %v164
        %v651 = vpop.permute.xlu0 %650
        %653 = vset.pattern.permute.xlu0 4
        %654 = vperm.xlu0 %653, %v165
        %v655 = vpop.permute.xlu0 %654
        %657 = vset.pattern.permute.xlu0 4
        %658 = vperm.xlu0 %657, %v166
        %v659 = vpop.permute.xlu0 %658
        %661 = vset.pattern.permute.xlu0 4
        %662 = vperm.xlu0 %661, %v167
        %v663 = vpop.permute.xlu0 %662
        %665 = vset.pattern.permute.xlu0 4
        %666 = vperm.xlu0 %665, %v168
        %v667 = vpop.permute.xlu0 %666
        %669 = vset.pattern.permute.xlu0 4
        %670 = vperm.xlu0 %669, %v169
        %v671 = vpop.permute.xlu0 %670
        %673 = vset.pattern.permute.xlu0 4
        %674 = vperm.xlu0 %673, %v170
        %v675 = vpop.permute.xlu0 %674
        %677 = vset.pattern.permute.xlu0 4
        %678 = vperm.xlu0 %677, %v171
        %v679 = vpop.permute.xlu0 %678
        %681 = vset.pattern.permute.xlu0 4
        %682 = vperm.xlu0 %681, %v172
        %v683 = vpop.permute.xlu0 %682
        %685 = vset.pattern.permute.xlu0 4
        %686 = vperm.xlu0 %685, %v173
        %v687 = vpop.permute.xlu0 %686
        %689 = vset.pattern.permute.xlu0 4
        %690 = vperm.xlu0 %689, %v174
        %v691 = vpop.permute.xlu0 %690
        %693 = vset.pattern.permute.xlu0 4
        %694 = vperm.xlu0 %693, %v175
        %v695 = vpop.permute.xlu0 %694
        %v697 = vsub.f32 %v360, %v579
        %v698 = vsub.f32 %v364, %v579
        %v699 = vsub.f32 %v360, %v583
        %v700 = vsub.f32 %v364, %v583
        %v701 = vsub.f32 %v360, %v587
        %v702 = vsub.f32 %v364, %v587
        %v703 = vsub.f32 %v360, %v591
        %v704 = vsub.f32 %v364, %v591
        %v705 = vsub.f32 %v360, %v595
        %v706 = vsub.f32 %v364, %v595
        %v707 = vsub.f32 %v360, %v599
        %v708 = vsub.f32 %v364, %v599
        %v709 = vsub.f32 %v360, %v603
        %v710 = vsub.f32 %v364, %v603
        %v711 = vsub.f32 %v360, %v607
        %v712 = vsub.f32 %v364, %v607
        %v713 = vsub.f32 %v360, %v611
        %v714 = vsub.f32 %v364, %v611
        %v715 = vsub.f32 %v360, %v615
        %v716 = vsub.f32 %v364, %v615
        %v717 = vsub.f32 %v360, %v619
        %v718 = vsub.f32 %v364, %v619
        %v719 = vsub.f32 %v360, %v623
        %v720 = vsub.f32 %v364, %v623
        %v721 = vsub.f32 %v360, %v627
        %v722 = vsub.f32 %v364, %v627
        %v723 = vsub.f32 %v360, %v631
        %v724 = vsub.f32 %v364, %v631
        %v725 = vsub.f32 %v360, %v635
        %v726 = vsub.f32 %v364, %v635
        %v727 = vsub.f32 %v360, %v639
        %v728 = vsub.f32 %v364, %v639
        %v729 = vsub.f32 %v360, %v643
        %v730 = vsub.f32 %v364, %v643
        %v731 = vsub.f32 %v360, %v647
        %v732 = vsub.f32 %v364, %v647
        %v733 = vsub.f32 %v360, %v651
        %v734 = vsub.f32 %v364, %v651
        %v735 = vsub.f32 %v360, %v655
        %v736 = vsub.f32 %v364, %v655
        %v737 = vsub.f32 %v360, %v659
        %v738 = vsub.f32 %v364, %v659
        %v739 = vsub.f32 %v360, %v663
        %v740 = vsub.f32 %v364, %v663
        %v741 = vsub.f32 %v360, %v667
        %v742 = vsub.f32 %v364, %v667
        %v743 = vsub.f32 %v360, %v671
        %v744 = vsub.f32 %v364, %v671
        %v745 = vsub.f32 %v360, %v675
        %v746 = vsub.f32 %v364, %v675
        %v747 = vsub.f32 %v360, %v679
        %v748 = vsub.f32 %v364, %v679
        %v749 = vsub.f32 %v360, %v683
        %v750 = vsub.f32 %v364, %v683
        %v751 = vsub.f32 %v360, %v687
        %v752 = vsub.f32 %v364, %v687
        %v753 = vsub.f32 %v360, %v691
        %v754 = vsub.f32 %v364, %v691
        %v755 = vsub.f32 %v360, %v695
        %v756 = vsub.f32 %v364, %v695
        %v757 = vmul.f32 %v517, %v517
        %v758 = vmul.f32 %v518, %v518
        %v759 = vmul.f32 %v519, %v519
        %v760 = vmul.f32 %v520, %v520
        %v761 = vmul.f32 %v521, %v521
        %v762 = vmul.f32 %v522, %v522
        %v763 = vmul.f32 %v523, %v523
        %v764 = vmul.f32 %v524, %v524
        %v765 = vmul.f32 %v525, %v525
        %v766 = vmul.f32 %v526, %v526
        %v767 = vmul.f32 %v527, %v527
        %v768 = vmul.f32 %v528, %v528
        %v769 = vmul.f32 %v529, %v529
        %v770 = vmul.f32 %v530, %v530
        %v771 = vmul.f32 %v531, %v531
        %v772 = vmul.f32 %v532, %v532
        %v773 = vmul.f32 %v533, %v533
        %v774 = vmul.f32 %v534, %v534
        %v775 = vmul.f32 %v535, %v535
        %v776 = vmul.f32 %v536, %v536
        %v777 = vmul.f32 %v537, %v537
        %v778 = vmul.f32 %v538, %v538
        %v779 = vmul.f32 %v539, %v539
        %v780 = vmul.f32 %v540, %v540
        %v781 = vmul.f32 %v541, %v541
        %v782 = vmul.f32 %v542, %v542
        %v783 = vmul.f32 %v543, %v543
        %v784 = vmul.f32 %v544, %v544
        %v785 = vmul.f32 %v545, %v545
        %v786 = vmul.f32 %v546, %v546
        %v787 = vmul.f32 %v547, %v547
        %v788 = vmul.f32 %v548, %v548
        %v789 = vmul.f32 %v549, %v549
        %v790 = vmul.f32 %v550, %v550
        %v791 = vmul.f32 %v551, %v551
        %v792 = vmul.f32 %v552, %v552
        %v793 = vmul.f32 %v553, %v553
        %v794 = vmul.f32 %v554, %v554
        %v795 = vmul.f32 %v555, %v555
        %v796 = vmul.f32 %v556, %v556
        %v797 = vmul.f32 %v557, %v557
        %v798 = vmul.f32 %v558, %v558
        %v799 = vmul.f32 %v559, %v559
        %v800 = vmul.f32 %v560, %v560
        %v801 = vmul.f32 %v561, %v561
        %v802 = vmul.f32 %v562, %v562
        %v803 = vmul.f32 %v563, %v563
        %v804 = vmul.f32 %v564, %v564
        %v805 = vmul.f32 %v565, %v565
        %v806 = vmul.f32 %v566, %v566
        %v807 = vmul.f32 %v567, %v567
        %v808 = vmul.f32 %v568, %v568
        %v809 = vmul.f32 %v569, %v569
        %v810 = vmul.f32 %v570, %v570
        %v811 = vmul.f32 %v571, %v571
        %v812 = vmul.f32 %v572, %v572
        %v813 = vmul.f32 %v573, %v573
        %v814 = vmul.f32 %v574, %v574
        %v815 = vmul.f32 %v575, %v575
        %v816 = vmul.f32 %v576, %v576
        %817 = vset.pattern.permute.xlu0 2
        %818 = vperm.xlu0 %817, %v176
        %v819 = vpop.permute.xlu0 %818
        %821 = vset.pattern.permute.xlu0 2
        %822 = vperm.xlu0 %821, %v177
        %v823 = vpop.permute.xlu0 %822
        %825 = vset.pattern.permute.xlu0 2
        %826 = vperm.xlu0 %825, %v178
        %v827 = vpop.permute.xlu0 %826
        %829 = vset.pattern.permute.xlu0 2
        %830 = vperm.xlu0 %829, %v179
        %v831 = vpop.permute.xlu0 %830
        %833 = vset.pattern.permute.xlu0 2
        %834 = vperm.xlu0 %833, %v180
        %v835 = vpop.permute.xlu0 %834
        %837 = vset.pattern.permute.xlu0 2
        %838 = vperm.xlu0 %837, %v181
        %v839 = vpop.permute.xlu0 %838
        %841 = vset.pattern.permute.xlu0 2
        %842 = vperm.xlu0 %841, %v182
        %v843 = vpop.permute.xlu0 %842
        %845 = vset.pattern.permute.xlu0 2
        %846 = vperm.xlu0 %845, %v183
        %v847 = vpop.permute.xlu0 %846
        %849 = vset.pattern.permute.xlu0 2
        %850 = vperm.xlu0 %849, %v184
        %v851 = vpop.permute.xlu0 %850
        %853 = vset.pattern.permute.xlu0 2
        %854 = vperm.xlu0 %853, %v185
        %v855 = vpop.permute.xlu0 %854
        %857 = vset.pattern.permute.xlu0 2
        %858 = vperm.xlu0 %857, %v186
        %v859 = vpop.permute.xlu0 %858
        %861 = vset.pattern.permute.xlu0 2
        %862 = vperm.xlu0 %861, %v187
        %v863 = vpop.permute.xlu0 %862
        %865 = vset.pattern.permute.xlu0 2
        %866 = vperm.xlu0 %865, %v188
        %v867 = vpop.permute.xlu0 %866
        %869 = vset.pattern.permute.xlu0 2
        %870 = vperm.xlu0 %869, %v189
        %v871 = vpop.permute.xlu0 %870
        %873 = vset.pattern.permute.xlu0 2
        %874 = vperm.xlu0 %873, %v190
        %v875 = vpop.permute.xlu0 %874
        %877 = vset.pattern.permute.xlu0 2
        %878 = vperm.xlu0 %877, %v191
        %v879 = vpop.permute.xlu0 %878
        %881 = vset.pattern.permute.xlu0 2
        %882 = vperm.xlu0 %881, %v192
        %v883 = vpop.permute.xlu0 %882
        %885 = vset.pattern.permute.xlu0 2
        %886 = vperm.xlu0 %885, %v193
        %v887 = vpop.permute.xlu0 %886
        %889 = vset.pattern.permute.xlu0 2
        %890 = vperm.xlu0 %889, %v194
        %v891 = vpop.permute.xlu0 %890
        %893 = vset.pattern.permute.xlu0 2
        %894 = vperm.xlu0 %893, %v195
        %v895 = vpop.permute.xlu0 %894
        %897 = vset.pattern.permute.xlu0 2
        %898 = vperm.xlu0 %897, %v196
        %v899 = vpop.permute.xlu0 %898
        %901 = vset.pattern.permute.xlu0 2
        %902 = vperm.xlu0 %901, %v197
        %v903 = vpop.permute.xlu0 %902
        %905 = vset.pattern.permute.xlu0 2
        %906 = vperm.xlu0 %905, %v198
        %v907 = vpop.permute.xlu0 %906
        %909 = vset.pattern.permute.xlu0 2
        %910 = vperm.xlu0 %909, %v199
        %v911 = vpop.permute.xlu0 %910
        %913 = vset.pattern.permute.xlu0 2
        %914 = vperm.xlu0 %913, %v200
        %v915 = vpop.permute.xlu0 %914
        %917 = vset.pattern.permute.xlu0 2
        %918 = vperm.xlu0 %917, %v201
        %v919 = vpop.permute.xlu0 %918
        %921 = vset.pattern.permute.xlu0 2
        %922 = vperm.xlu0 %921, %v202
        %v923 = vpop.permute.xlu0 %922
        %925 = vset.pattern.permute.xlu0 2
        %926 = vperm.xlu0 %925, %v203
        %v927 = vpop.permute.xlu0 %926
        %929 = vset.pattern.permute.xlu0 2
        %930 = vperm.xlu0 %929, %v204
        %v931 = vpop.permute.xlu0 %930
        %933 = vset.pattern.permute.xlu0 2
        %934 = vperm.xlu0 %933, %v205
        %v935 = vpop.permute.xlu0 %934
        %v937 = vadd.f32 %v757, %v819
        %v938 = vadd.f32 %v758, %v819
        %v939 = vadd.f32 %v759, %v823
        %v940 = vadd.f32 %v760, %v823
        %v941 = vadd.f32 %v761, %v827
        %v942 = vadd.f32 %v762, %v827
        %v943 = vadd.f32 %v763, %v831
        %v944 = vadd.f32 %v764, %v831
        %v945 = vadd.f32 %v765, %v835
        %v946 = vadd.f32 %v766, %v835
        %v947 = vadd.f32 %v767, %v839
        %v948 = vadd.f32 %v768, %v839
        %v949 = vadd.f32 %v769, %v843
        %v950 = vadd.f32 %v770, %v843
        %v951 = vadd.f32 %v771, %v847
        %v952 = vadd.f32 %v772, %v847
        %v953 = vadd.f32 %v773, %v851
        %v954 = vadd.f32 %v774, %v851
        %v955 = vadd.f32 %v775, %v855
        %v956 = vadd.f32 %v776, %v855
        %v957 = vadd.f32 %v777, %v859
        %v958 = vadd.f32 %v778, %v859
        %v959 = vadd.f32 %v779, %v863
        %v960 = vadd.f32 %v780, %v863
        %v961 = vadd.f32 %v781, %v867
        %v962 = vadd.f32 %v782, %v867
        %v963 = vadd.f32 %v783, %v871
        %v964 = vadd.f32 %v784, %v871
        %v965 = vadd.f32 %v785, %v875
        %v966 = vadd.f32 %v786, %v875
        %v967 = vadd.f32 %v787, %v879
        %v968 = vadd.f32 %v788, %v879
        %v969 = vadd.f32 %v789, %v883
        %v970 = vadd.f32 %v790, %v883
        %v971 = vadd.f32 %v791, %v887
        %v972 = vadd.f32 %v792, %v887
        %v973 = vadd.f32 %v793, %v891
        %v974 = vadd.f32 %v794, %v891
        %v975 = vadd.f32 %v795, %v895
        %v976 = vadd.f32 %v796, %v895
        %v977 = vadd.f32 %v797, %v899
        %v978 = vadd.f32 %v798, %v899
        %v979 = vadd.f32 %v799, %v903
        %v980 = vadd.f32 %v800, %v903
        %v981 = vadd.f32 %v801, %v907
        %v982 = vadd.f32 %v802, %v907
        %v983 = vadd.f32 %v803, %v911
        %v984 = vadd.f32 %v804, %v911
        %v985 = vadd.f32 %v805, %v915
        %v986 = vadd.f32 %v806, %v915
        %v987 = vadd.f32 %v807, %v919
        %v988 = vadd.f32 %v808, %v919
        %v989 = vadd.f32 %v809, %v923
        %v990 = vadd.f32 %v810, %v923
        %v991 = vadd.f32 %v811, %v927
        %v992 = vadd.f32 %v812, %v927
        %v993 = vadd.f32 %v813, %v931
        %v994 = vadd.f32 %v814, %v931
        %v995 = vadd.f32 %v815, %v935
        %v996 = vadd.f32 %v816, %v935
        %998 = vset.pattern.permute.xlu0 0
        %999 = vperm.xlu0 %998, %v326
        %v1000 = vpop.permute.xlu0 %999
        %1003 = vset.pattern.permute.xlu0 0
        %1004 = vperm.xlu0 %1003, %v327
        %v1005 = vpop.permute.xlu0 %1004
        %1008 = vset.pattern.permute.xlu0 0
        %1009 = vperm.xlu0 %1008, %v328
        %v1010 = vpop.permute.xlu0 %1009
        %1013 = vset.pattern.permute.xlu0 0
        %1014 = vperm.xlu0 %1013, %v329
        %v1015 = vpop.permute.xlu0 %1014
        %1018 = vset.pattern.permute.xlu0 0
        %1019 = vperm.xlu0 %1018, %v330
        %v1020 = vpop.permute.xlu0 %1019
        %1023 = vset.pattern.permute.xlu0 0
        %1024 = vperm.xlu0 %1023, %v331
        %v1025 = vpop.permute.xlu0 %1024
        %1028 = vset.pattern.permute.xlu0 0
        %1029 = vperm.xlu0 %1028, %v332
        %v1030 = vpop.permute.xlu0 %1029
        %1033 = vset.pattern.permute.xlu0 0
        %1034 = vperm.xlu0 %1033, %v333
        %v1035 = vpop.permute.xlu0 %1034
        %1038 = vset.pattern.permute.xlu0 0
        %1039 = vperm.xlu0 %1038, %v334
        %v1040 = vpop.permute.xlu0 %1039
        %1043 = vset.pattern.permute.xlu0 0
        %1044 = vperm.xlu0 %1043, %v335
        %v1045 = vpop.permute.xlu0 %1044
        %1048 = vset.pattern.permute.xlu0 0
        %1049 = vperm.xlu0 %1048, %v336
        %v1050 = vpop.permute.xlu0 %1049
        %1053 = vset.pattern.permute.xlu0 0
        %1054 = vperm.xlu0 %1053, %v337
        %v1055 = vpop.permute.xlu0 %1054
        %1058 = vset.pattern.permute.xlu0 0
        %1059 = vperm.xlu0 %1058, %v338
        %v1060 = vpop.permute.xlu0 %1059
        %1063 = vset.pattern.permute.xlu0 0
        %1064 = vperm.xlu0 %1063, %v339
        %v1065 = vpop.permute.xlu0 %1064
        %1068 = vset.pattern.permute.xlu0 0
        %1069 = vperm.xlu0 %1068, %v340
        %v1070 = vpop.permute.xlu0 %1069
        %1073 = vset.pattern.permute.xlu0 0
        %1074 = vperm.xlu0 %1073, %v341
        %v1075 = vpop.permute.xlu0 %1074
        %1078 = vset.pattern.permute.xlu0 0
        %1079 = vperm.xlu0 %1078, %v342
        %v1080 = vpop.permute.xlu0 %1079
        %1083 = vset.pattern.permute.xlu0 0
        %1084 = vperm.xlu0 %1083, %v343
        %v1085 = vpop.permute.xlu0 %1084
        %1088 = vset.pattern.permute.xlu0 0
        %1089 = vperm.xlu0 %1088, %v344
        %v1090 = vpop.permute.xlu0 %1089
        %1093 = vset.pattern.permute.xlu0 0
        %1094 = vperm.xlu0 %1093, %v345
        %v1095 = vpop.permute.xlu0 %1094
        %1098 = vset.pattern.permute.xlu0 0
        %1099 = vperm.xlu0 %1098, %v346
        %v1100 = vpop.permute.xlu0 %1099
        %1103 = vset.pattern.permute.xlu0 0
        %1104 = vperm.xlu0 %1103, %v347
        %v1105 = vpop.permute.xlu0 %1104
        %1108 = vset.pattern.permute.xlu0 0
        %1109 = vperm.xlu0 %1108, %v348
        %v1110 = vpop.permute.xlu0 %1109
        %1113 = vset.pattern.permute.xlu0 0
        %1114 = vperm.xlu0 %1113, %v349
        %v1115 = vpop.permute.xlu0 %1114
        %1118 = vset.pattern.permute.xlu0 0
        %1119 = vperm.xlu0 %1118, %v350
        %v1120 = vpop.permute.xlu0 %1119
        %1123 = vset.pattern.permute.xlu0 0
        %1124 = vperm.xlu0 %1123, %v351
        %v1125 = vpop.permute.xlu0 %1124
        %1128 = vset.pattern.permute.xlu0 0
        %1129 = vperm.xlu0 %1128, %v352
        %v1130 = vpop.permute.xlu0 %1129
        %1133 = vset.pattern.permute.xlu0 0
        %1134 = vperm.xlu0 %1133, %v353
        %v1135 = vpop.permute.xlu0 %1134
        %1138 = vset.pattern.permute.xlu0 0
        %1139 = vperm.xlu0 %1138, %v354
        %v1140 = vpop.permute.xlu0 %1139
        %1143 = vset.pattern.permute.xlu0 0
        %1144 = vperm.xlu0 %1143, %v355
        %v1145 = vpop.permute.xlu0 %1144
        %v1147 = vrcp.pop %v937
        %v1148 = vmul.f32 %v1000, %v1147
        %v1149 = vrcp.pop %v938
        %v1150 = vmul.f32 %v1000, %v1149
        %v1151 = vrcp.pop %v939
        %v1152 = vmul.f32 %v1005, %v1151
        %v1153 = vrcp.pop %v940
        %v1154 = vmul.f32 %v1005, %v1153
        %v1155 = vrcp.pop %v941
        %v1156 = vmul.f32 %v1010, %v1155
        %v1157 = vrcp.pop %v942
        %v1158 = vmul.f32 %v1010, %v1157
        %v1159 = vrcp.pop %v943
        %v1160 = vmul.f32 %v1015, %v1159
        %v1161 = vrcp.pop %v944
        %v1162 = vmul.f32 %v1015, %v1161
        %v1163 = vrcp.pop %v945
        %v1164 = vmul.f32 %v1020, %v1163
        %v1165 = vrcp.pop %v946
        %v1166 = vmul.f32 %v1020, %v1165
        %v1167 = vrcp.pop %v947
        %v1168 = vmul.f32 %v1025, %v1167
        %v1169 = vrcp.pop %v948
        %v1170 = vmul.f32 %v1025, %v1169
        %v1171 = vrcp.pop %v949
        %v1172 = vmul.f32 %v1030, %v1171
        %v1173 = vrcp.pop %v950
        %v1174 = vmul.f32 %v1030, %v1173
        %v1175 = vrcp.pop %v951
        %v1176 = vmul.f32 %v1035, %v1175
        %v1177 = vrcp.pop %v952
        %v1178 = vmul.f32 %v1035, %v1177
        %v1179 = vrcp.pop %v953
        %v1180 = vmul.f32 %v1040, %v1179
        %v1181 = vrcp.pop %v954
        %v1182 = vmul.f32 %v1040, %v1181
        %v1183 = vrcp.pop %v955
        %v1184 = vmul.f32 %v1045, %v1183
        %v1185 = vrcp.pop %v956
        %v1186 = vmul.f32 %v1045, %v1185
        %v1187 = vrcp.pop %v957
        %v1188 = vmul.f32 %v1050, %v1187
        %v1189 = vrcp.pop %v958
        %v1190 = vmul.f32 %v1050, %v1189
        %v1191 = vrcp.pop %v959
        %v1192 = vmul.f32 %v1055, %v1191
        %v1193 = vrcp.pop %v960
        %v1194 = vmul.f32 %v1055, %v1193
        %v1195 = vrcp.pop %v961
        %v1196 = vmul.f32 %v1060, %v1195
        %v1197 = vrcp.pop %v962
        %v1198 = vmul.f32 %v1060, %v1197
        %v1199 = vrcp.pop %v963
        %v1200 = vmul.f32 %v1065, %v1199
        %v1201 = vrcp.pop %v964
        %v1202 = vmul.f32 %v1065, %v1201
        %v1203 = vrcp.pop %v965
        %v1204 = vmul.f32 %v1070, %v1203
        %v1205 = vrcp.pop %v966
        %v1206 = vmul.f32 %v1070, %v1205
        %v1207 = vrcp.pop %v967
        %v1208 = vmul.f32 %v1075, %v1207
        %v1209 = vrcp.pop %v968
        %v1210 = vmul.f32 %v1075, %v1209
        %v1211 = vrcp.pop %v969
        %v1212 = vmul.f32 %v1080, %v1211
        %v1213 = vrcp.pop %v970
        %v1214 = vmul.f32 %v1080, %v1213
        %v1215 = vrcp.pop %v971
        %v1216 = vmul.f32 %v1085, %v1215
        %v1217 = vrcp.pop %v972
        %v1218 = vmul.f32 %v1085, %v1217
        %v1219 = vrcp.pop %v973
        %v1220 = vmul.f32 %v1090, %v1219
        %v1221 = vrcp.pop %v974
        %v1222 = vmul.f32 %v1090, %v1221
        %v1223 = vrcp.pop %v975
        %v1224 = vmul.f32 %v1095, %v1223
        %v1225 = vrcp.pop %v976
        %v1226 = vmul.f32 %v1095, %v1225
        %v1227 = vrcp.pop %v977
        %v1228 = vmul.f32 %v1100, %v1227
        %v1229 = vrcp.pop %v978
        %v1230 = vmul.f32 %v1100, %v1229
        %v1231 = vrcp.pop %v979
        %v1232 = vmul.f32 %v1105, %v1231
        %v1233 = vrcp.pop %v980
        %v1234 = vmul.f32 %v1105, %v1233
        %v1235 = vrcp.pop %v981
        %v1236 = vmul.f32 %v1110, %v1235
        %v1237 = vrcp.pop %v982
        %v1238 = vmul.f32 %v1110, %v1237
        %v1239 = vrcp.pop %v983
        %v1240 = vmul.f32 %v1115, %v1239
        %v1241 = vrcp.pop %v984
        %v1242 = vmul.f32 %v1115, %v1241
        %v1243 = vrcp.pop %v985
        %v1244 = vmul.f32 %v1120, %v1243
        %v1245 = vrcp.pop %v986
        %v1246 = vmul.f32 %v1120, %v1245
        %v1247 = vrcp.pop %v987
        %v1248 = vmul.f32 %v1125, %v1247
        %v1249 = vrcp.pop %v988
        %v1250 = vmul.f32 %v1125, %v1249
        %v1251 = vrcp.pop %v989
        %v1252 = vmul.f32 %v1130, %v1251
        %v1253 = vrcp.pop %v990
        %v1254 = vmul.f32 %v1130, %v1253
        %v1255 = vrcp.pop %v991
        %v1256 = vmul.f32 %v1135, %v1255
        %v1257 = vrcp.pop %v992
        %v1258 = vmul.f32 %v1135, %v1257
        %v1259 = vrcp.pop %v993
        %v1260 = vmul.f32 %v1140, %v1259
        %v1261 = vrcp.pop %v994
        %v1262 = vmul.f32 %v1140, %v1261
        %v1263 = vrcp.pop %v995
        %v1264 = vmul.f32 %v1145, %v1263
        %v1265 = vrcp.pop %v996
        %v1266 = vmul.f32 %v1145, %v1265
        %v1267 = vmul.f32 %v697, %v697
        %v1268 = vmul.f32 %v698, %v698
        %v1269 = vmul.f32 %v699, %v699
        %v1270 = vmul.f32 %v700, %v700
        %v1271 = vmul.f32 %v701, %v701
        %v1272 = vmul.f32 %v702, %v702
        %v1273 = vmul.f32 %v703, %v703
        %v1274 = vmul.f32 %v704, %v704
        %v1275 = vmul.f32 %v705, %v705
        %v1276 = vmul.f32 %v706, %v706
        %v1277 = vmul.f32 %v707, %v707
        %v1278 = vmul.f32 %v708, %v708
        %v1279 = vmul.f32 %v709, %v709
        %v1280 = vmul.f32 %v710, %v710
        %v1281 = vmul.f32 %v711, %v711
        %v1282 = vmul.f32 %v712, %v712
        %v1283 = vmul.f32 %v713, %v713
        %v1284 = vmul.f32 %v714, %v714
        %v1285 = vmul.f32 %v715, %v715
        %v1286 = vmul.f32 %v716, %v716
        %v1287 = vmul.f32 %v717, %v717
        %v1288 = vmul.f32 %v718, %v718
        %v1289 = vmul.f32 %v719, %v719
        %v1290 = vmul.f32 %v720, %v720
        %v1291 = vmul.f32 %v721, %v721
        %v1292 = vmul.f32 %v722, %v722
        %v1293 = vmul.f32 %v723, %v723
        %v1294 = vmul.f32 %v724, %v724
        %v1295 = vmul.f32 %v725, %v725
        %v1296 = vmul.f32 %v726, %v726
        %v1297 = vmul.f32 %v727, %v727
        %v1298 = vmul.f32 %v728, %v728
        %v1299 = vmul.f32 %v729, %v729
        %v1300 = vmul.f32 %v730, %v730
        %v1301 = vmul.f32 %v731, %v731
        %v1302 = vmul.f32 %v732, %v732
        %v1303 = vmul.f32 %v733, %v733
        %v1304 = vmul.f32 %v734, %v734
        %v1305 = vmul.f32 %v735, %v735
        %v1306 = vmul.f32 %v736, %v736
        %v1307 = vmul.f32 %v737, %v737
        %v1308 = vmul.f32 %v738, %v738
        %v1309 = vmul.f32 %v739, %v739
        %v1310 = vmul.f32 %v740, %v740
        %v1311 = vmul.f32 %v741, %v741
        %v1312 = vmul.f32 %v742, %v742
        %v1313 = vmul.f32 %v743, %v743
        %v1314 = vmul.f32 %v744, %v744
        %v1315 = vmul.f32 %v745, %v745
        %v1316 = vmul.f32 %v746, %v746
        %v1317 = vmul.f32 %v747, %v747
        %v1318 = vmul.f32 %v748, %v748
        %v1319 = vmul.f32 %v749, %v749
        %v1320 = vmul.f32 %v750, %v750
        %v1321 = vmul.f32 %v751, %v751
        %v1322 = vmul.f32 %v752, %v752
        %v1323 = vmul.f32 %v753, %v753
        %v1324 = vmul.f32 %v754, %v754
        %v1325 = vmul.f32 %v755, %v755
        %v1326 = vmul.f32 %v756, %v756
        %1327 = vset.pattern.permute.xlu0 5
        %1328 = vperm.xlu0 %1327, %v176
        %v1329 = vpop.permute.xlu0 %1328
        %1331 = vset.pattern.permute.xlu0 5
        %1332 = vperm.xlu0 %1331, %v177
        %v1333 = vpop.permute.xlu0 %1332
        %1335 = vset.pattern.permute.xlu0 5
        %1336 = vperm.xlu0 %1335, %v178
        %v1337 = vpop.permute.xlu0 %1336
        %1339 = vset.pattern.permute.xlu0 5
        %1340 = vperm.xlu0 %1339, %v179
        %v1341 = vpop.permute.xlu0 %1340
        %1343 = vset.pattern.permute.xlu0 5
        %1344 = vperm.xlu0 %1343, %v180
        %v1345 = vpop.permute.xlu0 %1344
        %1347 = vset.pattern.permute.xlu0 5
        %1348 = vperm.xlu0 %1347, %v181
        %v1349 = vpop.permute.xlu0 %1348
        %1351 = vset.pattern.permute.xlu0 5
        %1352 = vperm.xlu0 %1351, %v182
        %v1353 = vpop.permute.xlu0 %1352
        %1355 = vset.pattern.permute.xlu0 5
        %1356 = vperm.xlu0 %1355, %v183
        %v1357 = vpop.permute.xlu0 %1356
        %1359 = vset.pattern.permute.xlu0 5
        %1360 = vperm.xlu0 %1359, %v184
        %v1361 = vpop.permute.xlu0 %1360
        %1363 = vset.pattern.permute.xlu0 5
        %1364 = vperm.xlu0 %1363, %v185
        %v1365 = vpop.permute.xlu0 %1364
        %1367 = vset.pattern.permute.xlu0 5
        %1368 = vperm.xlu0 %1367, %v186
        %v1369 = vpop.permute.xlu0 %1368
        %1371 = vset.pattern.permute.xlu0 5
        %1372 = vperm.xlu0 %1371, %v187
        %v1373 = vpop.permute.xlu0 %1372
        %1375 = vset.pattern.permute.xlu0 5
        %1376 = vperm.xlu0 %1375, %v188
        %v1377 = vpop.permute.xlu0 %1376
        %1379 = vset.pattern.permute.xlu0 5
        %1380 = vperm.xlu0 %1379, %v189
        %v1381 = vpop.permute.xlu0 %1380
        %1383 = vset.pattern.permute.xlu0 5
        %1384 = vperm.xlu0 %1383, %v190
        %v1385 = vpop.permute.xlu0 %1384
        %1387 = vset.pattern.permute.xlu0 5
        %1388 = vperm.xlu0 %1387, %v191
        %v1389 = vpop.permute.xlu0 %1388
        %1391 = vset.pattern.permute.xlu0 5
        %1392 = vperm.xlu0 %1391, %v192
        %v1393 = vpop.permute.xlu0 %1392
        %1395 = vset.pattern.permute.xlu0 5
        %1396 = vperm.xlu0 %1395, %v193
        %v1397 = vpop.permute.xlu0 %1396
        %1399 = vset.pattern.permute.xlu0 5
        %1400 = vperm.xlu0 %1399, %v194
        %v1401 = vpop.permute.xlu0 %1400
        %1403 = vset.pattern.permute.xlu0 5
        %1404 = vperm.xlu0 %1403, %v195
        %v1405 = vpop.permute.xlu0 %1404
        %1407 = vset.pattern.permute.xlu0 5
        %1408 = vperm.xlu0 %1407, %v196
        %v1409 = vpop.permute.xlu0 %1408
        %1411 = vset.pattern.permute.xlu0 5
        %1412 = vperm.xlu0 %1411, %v197
        %v1413 = vpop.permute.xlu0 %1412
        %1415 = vset.pattern.permute.xlu0 5
        %1416 = vperm.xlu0 %1415, %v198
        %v1417 = vpop.permute.xlu0 %1416
        %1419 = vset.pattern.permute.xlu0 5
        %1420 = vperm.xlu0 %1419, %v199
        %v1421 = vpop.permute.xlu0 %1420
        %1423 = vset.pattern.permute.xlu0 5
        %1424 = vperm.xlu0 %1423, %v200
        %v1425 = vpop.permute.xlu0 %1424
        %1427 = vset.pattern.permute.xlu0 5
        %1428 = vperm.xlu0 %1427, %v201
        %v1429 = vpop.permute.xlu0 %1428
        %1431 = vset.pattern.permute.xlu0 5
        %1432 = vperm.xlu0 %1431, %v202
        %v1433 = vpop.permute.xlu0 %1432
        %1435 = vset.pattern.permute.xlu0 5
        %1436 = vperm.xlu0 %1435, %v203
        %v1437 = vpop.permute.xlu0 %1436
        %1439 = vset.pattern.permute.xlu0 5
        %1440 = vperm.xlu0 %1439, %v204
        %v1441 = vpop.permute.xlu0 %1440
        %1443 = vset.pattern.permute.xlu0 5
        %1444 = vperm.xlu0 %1443, %v205
        %v1445 = vpop.permute.xlu0 %1444
        %v1447 = vadd.f32 %v1267, %v1329
        %v1448 = vadd.f32 %v1268, %v1329
        %v1449 = vadd.f32 %v1269, %v1333
        %v1450 = vadd.f32 %v1270, %v1333
        %v1451 = vadd.f32 %v1271, %v1337
        %v1452 = vadd.f32 %v1272, %v1337
        %v1453 = vadd.f32 %v1273, %v1341
        %v1454 = vadd.f32 %v1274, %v1341
        %v1455 = vadd.f32 %v1275, %v1345
        %v1456 = vadd.f32 %v1276, %v1345
        %v1457 = vadd.f32 %v1277, %v1349
        %v1458 = vadd.f32 %v1278, %v1349
        %v1459 = vadd.f32 %v1279, %v1353
        %v1460 = vadd.f32 %v1280, %v1353
        %v1461 = vadd.f32 %v1281, %v1357
        %v1462 = vadd.f32 %v1282, %v1357
        %v1463 = vadd.f32 %v1283, %v1361
        %v1464 = vadd.f32 %v1284, %v1361
        %v1465 = vadd.f32 %v1285, %v1365
        %v1466 = vadd.f32 %v1286, %v1365
        %v1467 = vadd.f32 %v1287, %v1369
        %v1468 = vadd.f32 %v1288, %v1369
        %v1469 = vadd.f32 %v1289, %v1373
        %v1470 = vadd.f32 %v1290, %v1373
        %v1471 = vadd.f32 %v1291, %v1377
        %v1472 = vadd.f32 %v1292, %v1377
        %v1473 = vadd.f32 %v1293, %v1381
        %v1474 = vadd.f32 %v1294, %v1381
        %v1475 = vadd.f32 %v1295, %v1385
        %v1476 = vadd.f32 %v1296, %v1385
        %v1477 = vadd.f32 %v1297, %v1389
        %v1478 = vadd.f32 %v1298, %v1389
        %v1479 = vadd.f32 %v1299, %v1393
        %v1480 = vadd.f32 %v1300, %v1393
        %v1481 = vadd.f32 %v1301, %v1397
        %v1482 = vadd.f32 %v1302, %v1397
        %v1483 = vadd.f32 %v1303, %v1401
        %v1484 = vadd.f32 %v1304, %v1401
        %v1485 = vadd.f32 %v1305, %v1405
        %v1486 = vadd.f32 %v1306, %v1405
        %v1487 = vadd.f32 %v1307, %v1409
        %v1488 = vadd.f32 %v1308, %v1409
        %v1489 = vadd.f32 %v1309, %v1413
        %v1490 = vadd.f32 %v1310, %v1413
        %v1491 = vadd.f32 %v1311, %v1417
        %v1492 = vadd.f32 %v1312, %v1417
        %v1493 = vadd.f32 %v1313, %v1421
        %v1494 = vadd.f32 %v1314, %v1421
        %v1495 = vadd.f32 %v1315, %v1425
        %v1496 = vadd.f32 %v1316, %v1425
        %v1497 = vadd.f32 %v1317, %v1429
        %v1498 = vadd.f32 %v1318, %v1429
        %v1499 = vadd.f32 %v1319, %v1433
        %v1500 = vadd.f32 %v1320, %v1433
        %v1501 = vadd.f32 %v1321, %v1437
        %v1502 = vadd.f32 %v1322, %v1437
        %v1503 = vadd.f32 %v1323, %v1441
        %v1504 = vadd.f32 %v1324, %v1441
        %v1505 = vadd.f32 %v1325, %v1445
        %v1506 = vadd.f32 %v1326, %v1445
        %1507 = vset.pattern.permute.xlu0 3
        %1508 = vperm.xlu0 %1507, %v326
        %v1509 = vpop.permute.xlu0 %1508
        %1511 = vset.pattern.permute.xlu0 3
        %1512 = vperm.xlu0 %1511, %v327
        %v1513 = vpop.permute.xlu0 %1512
        %1515 = vset.pattern.permute.xlu0 3
        %1516 = vperm.xlu0 %1515, %v328
        %v1517 = vpop.permute.xlu0 %1516
        %1519 = vset.pattern.permute.xlu0 3
        %1520 = vperm.xlu0 %1519, %v329
        %v1521 = vpop.permute.xlu0 %1520
        %1523 = vset.pattern.permute.xlu0 3
        %1524 = vperm.xlu0 %1523, %v330
        %v1525 = vpop.permute.xlu0 %1524
        %1527 = vset.pattern.permute.xlu0 3
        %1528 = vperm.xlu0 %1527, %v331
        %v1529 = vpop.permute.xlu0 %1528
        %1531 = vset.pattern.permute.xlu0 3
        %1532 = vperm.xlu0 %1531, %v332
        %v1533 = vpop.permute.xlu0 %1532
        %1535 = vset.pattern.permute.xlu0 3
        %1536 = vperm.xlu0 %1535, %v333
        %v1537 = vpop.permute.xlu0 %1536
        %1539 = vset.pattern.permute.xlu0 3
        %1540 = vperm.xlu0 %1539, %v334
        %v1541 = vpop.permute.xlu0 %1540
        %1543 = vset.pattern.permute.xlu0 3
        %1544 = vperm.xlu0 %1543, %v335
        %v1545 = vpop.permute.xlu0 %1544
        %1547 = vset.pattern.permute.xlu0 3
        %1548 = vperm.xlu0 %1547, %v336
        %v1549 = vpop.permute.xlu0 %1548
        %1551 = vset.pattern.permute.xlu0 3
        %1552 = vperm.xlu0 %1551, %v337
        %v1553 = vpop.permute.xlu0 %1552
        %1555 = vset.pattern.permute.xlu0 3
        %1556 = vperm.xlu0 %1555, %v338
        %v1557 = vpop.permute.xlu0 %1556
        %1559 = vset.pattern.permute.xlu0 3
        %1560 = vperm.xlu0 %1559, %v339
        %v1561 = vpop.permute.xlu0 %1560
        %1563 = vset.pattern.permute.xlu0 3
        %1564 = vperm.xlu0 %1563, %v340
        %v1565 = vpop.permute.xlu0 %1564
        %1567 = vset.pattern.permute.xlu0 3
        %1568 = vperm.xlu0 %1567, %v341
        %v1569 = vpop.permute.xlu0 %1568
        %1571 = vset.pattern.permute.xlu0 3
        %1572 = vperm.xlu0 %1571, %v342
        %v1573 = vpop.permute.xlu0 %1572
        %1575 = vset.pattern.permute.xlu0 3
        %1576 = vperm.xlu0 %1575, %v343
        %v1577 = vpop.permute.xlu0 %1576
        %1579 = vset.pattern.permute.xlu0 3
        %1580 = vperm.xlu0 %1579, %v344
        %v1581 = vpop.permute.xlu0 %1580
        %1583 = vset.pattern.permute.xlu0 3
        %1584 = vperm.xlu0 %1583, %v345
        %v1585 = vpop.permute.xlu0 %1584
        %1587 = vset.pattern.permute.xlu0 3
        %1588 = vperm.xlu0 %1587, %v346
        %v1589 = vpop.permute.xlu0 %1588
        %1591 = vset.pattern.permute.xlu0 3
        %1592 = vperm.xlu0 %1591, %v347
        %v1593 = vpop.permute.xlu0 %1592
        %1595 = vset.pattern.permute.xlu0 3
        %1596 = vperm.xlu0 %1595, %v348
        %v1597 = vpop.permute.xlu0 %1596
        %1599 = vset.pattern.permute.xlu0 3
        %1600 = vperm.xlu0 %1599, %v349
        %v1601 = vpop.permute.xlu0 %1600
        %1603 = vset.pattern.permute.xlu0 3
        %1604 = vperm.xlu0 %1603, %v350
        %v1605 = vpop.permute.xlu0 %1604
        %1607 = vset.pattern.permute.xlu0 3
        %1608 = vperm.xlu0 %1607, %v351
        %v1609 = vpop.permute.xlu0 %1608
        %1611 = vset.pattern.permute.xlu0 3
        %1612 = vperm.xlu0 %1611, %v352
        %v1613 = vpop.permute.xlu0 %1612
        %1615 = vset.pattern.permute.xlu0 3
        %1616 = vperm.xlu0 %1615, %v353
        %v1617 = vpop.permute.xlu0 %1616
        %1619 = vset.pattern.permute.xlu0 3
        %1620 = vperm.xlu0 %1619, %v354
        %v1621 = vpop.permute.xlu0 %1620
        %1623 = vset.pattern.permute.xlu0 3
        %1624 = vperm.xlu0 %1623, %v355
        %v1625 = vpop.permute.xlu0 %1624
        %v1627 = vrcp.pop %v1447
        %v1628 = vmul.f32 %v1509, %v1627
        %v1629 = vrcp.pop %v1448
        %v1630 = vmul.f32 %v1509, %v1629
        %v1631 = vrcp.pop %v1449
        %v1632 = vmul.f32 %v1513, %v1631
        %v1633 = vrcp.pop %v1450
        %v1634 = vmul.f32 %v1513, %v1633
        %v1635 = vrcp.pop %v1451
        %v1636 = vmul.f32 %v1517, %v1635
        %v1637 = vrcp.pop %v1452
        %v1638 = vmul.f32 %v1517, %v1637
        %v1639 = vrcp.pop %v1453
        %v1640 = vmul.f32 %v1521, %v1639
        %v1641 = vrcp.pop %v1454
        %v1642 = vmul.f32 %v1521, %v1641
        %v1643 = vrcp.pop %v1455
        %v1644 = vmul.f32 %v1525, %v1643
        %v1645 = vrcp.pop %v1456
        %v1646 = vmul.f32 %v1525, %v1645
        %v1647 = vrcp.pop %v1457
        %v1648 = vmul.f32 %v1529, %v1647
        %v1649 = vrcp.pop %v1458
        %v1650 = vmul.f32 %v1529, %v1649
        %v1651 = vrcp.pop %v1459
        %v1652 = vmul.f32 %v1533, %v1651
        %v1653 = vrcp.pop %v1460
        %v1654 = vmul.f32 %v1533, %v1653
        %v1655 = vrcp.pop %v1461
        %v1656 = vmul.f32 %v1537, %v1655
        %v1657 = vrcp.pop %v1462
        %v1658 = vmul.f32 %v1537, %v1657
        %v1659 = vrcp.pop %v1463
        %v1660 = vmul.f32 %v1541, %v1659
        %v1661 = vrcp.pop %v1464
        %v1662 = vmul.f32 %v1541, %v1661
        %v1663 = vrcp.pop %v1465
        %v1664 = vmul.f32 %v1545, %v1663
        %v1665 = vrcp.pop %v1466
        %v1666 = vmul.f32 %v1545, %v1665
        %v1667 = vrcp.pop %v1467
        %v1668 = vmul.f32 %v1549, %v1667
        %v1669 = vrcp.pop %v1468
        %v1670 = vmul.f32 %v1549, %v1669
        %v1671 = vrcp.pop %v1469
        %v1672 = vmul.f32 %v1553, %v1671
        %v1673 = vrcp.pop %v1470
        %v1674 = vmul.f32 %v1553, %v1673
        %v1675 = vrcp.pop %v1471
        %v1676 = vmul.f32 %v1557, %v1675
        %v1677 = vrcp.pop %v1472
        %v1678 = vmul.f32 %v1557, %v1677
        %v1679 = vrcp.pop %v1473
        %v1680 = vmul.f32 %v1561, %v1679
        %v1681 = vrcp.pop %v1474
        %v1682 = vmul.f32 %v1561, %v1681
        %v1683 = vrcp.pop %v1475
        %v1684 = vmul.f32 %v1565, %v1683
        %v1685 = vrcp.pop %v1476
        %v1686 = vmul.f32 %v1565, %v1685
        %v1687 = vrcp.pop %v1477
        %v1688 = vmul.f32 %v1569, %v1687
        %v1689 = vrcp.pop %v1478
        %v1690 = vmul.f32 %v1569, %v1689
        %v1691 = vrcp.pop %v1479
        %v1692 = vmul.f32 %v1573, %v1691
        %v1693 = vrcp.pop %v1480
        %v1694 = vmul.f32 %v1573, %v1693
        %v1695 = vrcp.pop %v1481
        %v1696 = vmul.f32 %v1577, %v1695
        %v1697 = vrcp.pop %v1482
        %v1698 = vmul.f32 %v1577, %v1697
        %v1699 = vrcp.pop %v1483
        %v1700 = vmul.f32 %v1581, %v1699
        %v1701 = vrcp.pop %v1484
        %v1702 = vmul.f32 %v1581, %v1701
        %v1703 = vrcp.pop %v1485
        %v1704 = vmul.f32 %v1585, %v1703
        %v1705 = vrcp.pop %v1486
        %v1706 = vmul.f32 %v1585, %v1705
        %v1707 = vrcp.pop %v1487
        %v1708 = vmul.f32 %v1589, %v1707
        %v1709 = vrcp.pop %v1488
        %v1710 = vmul.f32 %v1589, %v1709
        %v1711 = vrcp.pop %v1489
        %v1712 = vmul.f32 %v1593, %v1711
        %v1713 = vrcp.pop %v1490
        %v1714 = vmul.f32 %v1593, %v1713
        %v1715 = vrcp.pop %v1491
        %v1716 = vmul.f32 %v1597, %v1715
        %v1717 = vrcp.pop %v1492
        %v1718 = vmul.f32 %v1597, %v1717
        %v1719 = vrcp.pop %v1493
        %v1720 = vmul.f32 %v1601, %v1719
        %v1721 = vrcp.pop %v1494
        %v1722 = vmul.f32 %v1601, %v1721
        %v1723 = vrcp.pop %v1495
        %v1724 = vmul.f32 %v1605, %v1723
        %v1725 = vrcp.pop %v1496
        %v1726 = vmul.f32 %v1605, %v1725
        %v1727 = vrcp.pop %v1497
        %v1728 = vmul.f32 %v1609, %v1727
        %v1729 = vrcp.pop %v1498
        %v1730 = vmul.f32 %v1609, %v1729
        %v1731 = vrcp.pop %v1499
        %v1732 = vmul.f32 %v1613, %v1731
        %v1733 = vrcp.pop %v1500
        %v1734 = vmul.f32 %v1613, %v1733
        %v1735 = vrcp.pop %v1501
        %v1736 = vmul.f32 %v1617, %v1735
        %v1737 = vrcp.pop %v1502
        %v1738 = vmul.f32 %v1617, %v1737
        %v1739 = vrcp.pop %v1503
        %v1740 = vmul.f32 %v1621, %v1739
        %v1741 = vrcp.pop %v1504
        %v1742 = vmul.f32 %v1621, %v1741
        %v1743 = vrcp.pop %v1505
        %v1744 = vmul.f32 %v1625, %v1743
        %v1745 = vrcp.pop %v1506
        %v1746 = vmul.f32 %v1625, %v1745
        %1747 = vset.pattern.permute.xlu0 6
        %1748 = vperm.xlu0 %1747, %v146
        %v1749 = vpop.permute.xlu0 %1748
        %1751 = vset.pattern.permute.xlu0 6
        %1752 = vperm.xlu0 %1751, %v147
        %v1753 = vpop.permute.xlu0 %1752
        %1755 = vset.pattern.permute.xlu0 6
        %1756 = vperm.xlu0 %1755, %v148
        %v1757 = vpop.permute.xlu0 %1756
        %1759 = vset.pattern.permute.xlu0 6
        %1760 = vperm.xlu0 %1759, %v149
        %v1761 = vpop.permute.xlu0 %1760
        %1763 = vset.pattern.permute.xlu0 6
        %1764 = vperm.xlu0 %1763, %v150
        %v1765 = vpop.permute.xlu0 %1764
        %1767 = vset.pattern.permute.xlu0 6
        %1768 = vperm.xlu0 %1767, %v151
        %v1769 = vpop.permute.xlu0 %1768
        %1771 = vset.pattern.permute.xlu0 6
        %1772 = vperm.xlu0 %1771, %v152
        %v1773 = vpop.permute.xlu0 %1772
        %1775 = vset.pattern.permute.xlu0 6
        %1776 = vperm.xlu0 %1775, %v153
        %v1777 = vpop.permute.xlu0 %1776
        %1779 = vset.pattern.permute.xlu0 6
        %1780 = vperm.xlu0 %1779, %v154
        %v1781 = vpop.permute.xlu0 %1780
        %1783 = vset.pattern.permute.xlu0 6
        %1784 = vperm.xlu0 %1783, %v155
        %v1785 = vpop.permute.xlu0 %1784
        %1787 = vset.pattern.permute.xlu0 6
        %1788 = vperm.xlu0 %1787, %v156
        %v1789 = vpop.permute.xlu0 %1788
        %1791 = vset.pattern.permute.xlu0 6
        %1792 = vperm.xlu0 %1791, %v157
        %v1793 = vpop.permute.xlu0 %1792
        %1795 = vset.pattern.permute.xlu0 6
        %1796 = vperm.xlu0 %1795, %v158
        %v1797 = vpop.permute.xlu0 %1796
        %1799 = vset.pattern.permute.xlu0 6
        %1800 = vperm.xlu0 %1799, %v159
        %v1801 = vpop.permute.xlu0 %1800
        %1803 = vset.pattern.permute.xlu0 6
        %1804 = vperm.xlu0 %1803, %v160
        %v1805 = vpop.permute.xlu0 %1804
        %1807 = vset.pattern.permute.xlu0 6
        %1808 = vperm.xlu0 %1807, %v161
        %v1809 = vpop.permute.xlu0 %1808
        %1811 = vset.pattern.permute.xlu0 6
        %1812 = vperm.xlu0 %1811, %v162
        %v1813 = vpop.permute.xlu0 %1812
        %1815 = vset.pattern.permute.xlu0 6
        %1816 = vperm.xlu0 %1815, %v163
        %v1817 = vpop.permute.xlu0 %1816
        %1819 = vset.pattern.permute.xlu0 6
        %1820 = vperm.xlu0 %1819, %v164
        %v1821 = vpop.permute.xlu0 %1820
        %1823 = vset.pattern.permute.xlu0 6
        %1824 = vperm.xlu0 %1823, %v165
        %v1825 = vpop.permute.xlu0 %1824
        %1827 = vset.pattern.permute.xlu0 6
        %1828 = vperm.xlu0 %1827, %v166
        %v1829 = vpop.permute.xlu0 %1828
        %1831 = vset.pattern.permute.xlu0 6
        %1832 = vperm.xlu0 %1831, %v167
        %v1833 = vpop.permute.xlu0 %1832
        %1835 = vset.pattern.permute.xlu0 6
        %1836 = vperm.xlu0 %1835, %v168
        %v1837 = vpop.permute.xlu0 %1836
        %1839 = vset.pattern.permute.xlu0 6
        %1840 = vperm.xlu0 %1839, %v169
        %v1841 = vpop.permute.xlu0 %1840
        %1843 = vset.pattern.permute.xlu0 6
        %1844 = vperm.xlu0 %1843, %v170
        %v1845 = vpop.permute.xlu0 %1844
        %1847 = vset.pattern.permute.xlu0 6
        %1848 = vperm.xlu0 %1847, %v171
        %v1849 = vpop.permute.xlu0 %1848
        %1851 = vset.pattern.permute.xlu0 6
        %1852 = vperm.xlu0 %1851, %v172
        %v1853 = vpop.permute.xlu0 %1852
        %1855 = vset.pattern.permute.xlu0 6
        %1856 = vperm.xlu0 %1855, %v173
        %v1857 = vpop.permute.xlu0 %1856
        %1859 = vset.pattern.permute.xlu0 6
        %1860 = vperm.xlu0 %1859, %v174
        %v1861 = vpop.permute.xlu0 %1860
        %1863 = vset.pattern.permute.xlu0 6
        %1864 = vperm.xlu0 %1863, %v175
        %v1865 = vpop.permute.xlu0 %1864
        %v1867 = vmul.f32 %v1749, %v360
        %v1868 = vmul.f32 %v1749, %v364
        %v1869 = vmul.f32 %v1753, %v360
        %v1870 = vmul.f32 %v1753, %v364
        %v1871 = vmul.f32 %v1757, %v360
        %v1872 = vmul.f32 %v1757, %v364
        %v1873 = vmul.f32 %v1761, %v360
        %v1874 = vmul.f32 %v1761, %v364
        %v1875 = vmul.f32 %v1765, %v360
        %v1876 = vmul.f32 %v1765, %v364
        %v1877 = vmul.f32 %v1769, %v360
        %v1878 = vmul.f32 %v1769, %v364
        %v1879 = vmul.f32 %v1773, %v360
        %v1880 = vmul.f32 %v1773, %v364
        %v1881 = vmul.f32 %v1777, %v360
        %v1882 = vmul.f32 %v1777, %v364
        %v1883 = vmul.f32 %v1781, %v360
        %v1884 = vmul.f32 %v1781, %v364
        %v1885 = vmul.f32 %v1785, %v360
        %v1886 = vmul.f32 %v1785, %v364
        %v1887 = vmul.f32 %v1789, %v360
        %v1888 = vmul.f32 %v1789, %v364
        %v1889 = vmul.f32 %v1793, %v360
        %v1890 = vmul.f32 %v1793, %v364
        %v1891 = vmul.f32 %v1797, %v360
        %v1892 = vmul.f32 %v1797, %v364
        %v1893 = vmul.f32 %v1801, %v360
        %v1894 = vmul.f32 %v1801, %v364
        %v1895 = vmul.f32 %v1805, %v360
        %v1896 = vmul.f32 %v1805, %v364
        %v1897 = vmul.f32 %v1809, %v360
        %v1898 = vmul.f32 %v1809, %v364
        %v1899 = vmul.f32 %v1813, %v360
        %v1900 = vmul.f32 %v1813, %v364
        %v1901 = vmul.f32 %v1817, %v360
        %v1902 = vmul.f32 %v1817, %v364
        %v1903 = vmul.f32 %v1821, %v360
        %v1904 = vmul.f32 %v1821, %v364
        %v1905 = vmul.f32 %v1825, %v360
        %v1906 = vmul.f32 %v1825, %v364
        %v1907 = vmul.f32 %v1829, %v360
        %v1908 = vmul.f32 %v1829, %v364
        %v1909 = vmul.f32 %v1833, %v360
        %v1910 = vmul.f32 %v1833, %v364
        %v1911 = vmul.f32 %v1837, %v360
        %v1912 = vmul.f32 %v1837, %v364
        %v1913 = vmul.f32 %v1841, %v360
        %v1914 = vmul.f32 %v1841, %v364
        %v1915 = vmul.f32 %v1845, %v360
        %v1916 = vmul.f32 %v1845, %v364
        %v1917 = vmul.f32 %v1849, %v360
        %v1918 = vmul.f32 %v1849, %v364
        %v1919 = vmul.f32 %v1853, %v360
        %v1920 = vmul.f32 %v1853, %v364
        %v1921 = vmul.f32 %v1857, %v360
        %v1922 = vmul.f32 %v1857, %v364
        %v1923 = vmul.f32 %v1861, %v360
        %v1924 = vmul.f32 %v1861, %v364
        %v1925 = vmul.f32 %v1865, %v360
        %v1926 = vmul.f32 %v1865, %v364
        %1927 = vset.pattern.permute.xlu0 7
        %1928 = vperm.xlu0 %1927, %v146
        %v1929 = vpop.permute.xlu0 %1928
        %1931 = vset.pattern.permute.xlu0 7
        %1932 = vperm.xlu0 %1931, %v147
        %v1933 = vpop.permute.xlu0 %1932
        %1935 = vset.pattern.permute.xlu0 7
        %1936 = vperm.xlu0 %1935, %v148
        %v1937 = vpop.permute.xlu0 %1936
        %1939 = vset.pattern.permute.xlu0 7
        %1940 = vperm.xlu0 %1939, %v149
        %v1941 = vpop.permute.xlu0 %1940
        %1943 = vset.pattern.permute.xlu0 7
        %1944 = vperm.xlu0 %1943, %v150
        %v1945 = vpop.permute.xlu0 %1944
        %1947 = vset.pattern.permute.xlu0 7
        %1948 = vperm.xlu0 %1947, %v151
        %v1949 = vpop.permute.xlu0 %1948
        %1951 = vset.pattern.permute.xlu0 7
        %1952 = vperm.xlu0 %1951, %v152
        %v1953 = vpop.permute.xlu0 %1952
        %1955 = vset.pattern.permute.xlu0 7
        %1956 = vperm.xlu0 %1955, %v153
        %v1957 = vpop.permute.xlu0 %1956
        %1959 = vset.pattern.permute.xlu0 7
        %1960 = vperm.xlu0 %1959, %v154
        %v1961 = vpop.permute.xlu0 %1960
        %1963 = vset.pattern.permute.xlu0 7
        %1964 = vperm.xlu0 %1963, %v155
        %v1965 = vpop.permute.xlu0 %1964
        %1967 = vset.pattern.permute.xlu0 7
        %1968 = vperm.xlu0 %1967, %v156
        %v1969 = vpop.permute.xlu0 %1968
        %1971 = vset.pattern.permute.xlu0 7
        %1972 = vperm.xlu0 %1971, %v157
        %v1973 = vpop.permute.xlu0 %1972
        %1975 = vset.pattern.permute.xlu0 7
        %1976 = vperm.xlu0 %1975, %v158
        %v1977 = vpop.permute.xlu0 %1976
        %1979 = vset.pattern.permute.xlu0 7
        %1980 = vperm.xlu0 %1979, %v159
        %v1981 = vpop.permute.xlu0 %1980
        %1983 = vset.pattern.permute.xlu0 7
        %1984 = vperm.xlu0 %1983, %v160
        %v1985 = vpop.permute.xlu0 %1984
        %1987 = vset.pattern.permute.xlu0 7
        %1988 = vperm.xlu0 %1987, %v161
        %v1989 = vpop.permute.xlu0 %1988
        %1991 = vset.pattern.permute.xlu0 7
        %1992 = vperm.xlu0 %1991, %v162
        %v1993 = vpop.permute.xlu0 %1992
        %1995 = vset.pattern.permute.xlu0 7
        %1996 = vperm.xlu0 %1995, %v163
        %v1997 = vpop.permute.xlu0 %1996
        %1999 = vset.pattern.permute.xlu0 7
        %2000 = vperm.xlu0 %1999, %v164
        %v2001 = vpop.permute.xlu0 %2000
        %2003 = vset.pattern.permute.xlu0 7
        %2004 = vperm.xlu0 %2003, %v165
        %v2005 = vpop.permute.xlu0 %2004
        %2007 = vset.pattern.permute.xlu0 7
        %2008 = vperm.xlu0 %2007, %v166
        %v2009 = vpop.permute.xlu0 %2008
        %2011 = vset.pattern.permute.xlu0 7
        %2012 = vperm.xlu0 %2011, %v167
        %v2013 = vpop.permute.xlu0 %2012
        %2015 = vset.pattern.permute.xlu0 7
        %2016 = vperm.xlu0 %2015, %v168
        %v2017 = vpop.permute.xlu0 %2016
        %2019 = vset.pattern.permute.xlu0 7
        %2020 = vperm.xlu0 %2019, %v169
        %v2021 = vpop.permute.xlu0 %2020
        %2023 = vset.pattern.permute.xlu0 7
        %2024 = vperm.xlu0 %2023, %v170
        %v2025 = vpop.permute.xlu0 %2024
        %2027 = vset.pattern.permute.xlu0 7
        %2028 = vperm.xlu0 %2027, %v171
        %v2029 = vpop.permute.xlu0 %2028
        %2031 = vset.pattern.permute.xlu0 7
        %2032 = vperm.xlu0 %2031, %v172
        %v2033 = vpop.permute.xlu0 %2032
        %2035 = vset.pattern.permute.xlu0 7
        %2036 = vperm.xlu0 %2035, %v173
        %v2037 = vpop.permute.xlu0 %2036
        %2039 = vset.pattern.permute.xlu0 7
        %2040 = vperm.xlu0 %2039, %v174
        %v2041 = vpop.permute.xlu0 %2040
        %2043 = vset.pattern.permute.xlu0 7
        %2044 = vperm.xlu0 %2043, %v175
        %v2045 = vpop.permute.xlu0 %2044
        %v2047 = vadd.f32 %v1929, %v1867
        %v2048 = vadd.f32 %v1929, %v1868
        %v2049 = vadd.f32 %v1933, %v1869
        %v2050 = vadd.f32 %v1933, %v1870
        %v2051 = vadd.f32 %v1937, %v1871
        %v2052 = vadd.f32 %v1937, %v1872
        %v2053 = vadd.f32 %v1941, %v1873
        %v2054 = vadd.f32 %v1941, %v1874
        %v2055 = vadd.f32 %v1945, %v1875
        %v2056 = vadd.f32 %v1945, %v1876
        %v2057 = vadd.f32 %v1949, %v1877
        %v2058 = vadd.f32 %v1949, %v1878
        %v2059 = vadd.f32 %v1953, %v1879
        %v2060 = vadd.f32 %v1953, %v1880
        %v2061 = vadd.f32 %v1957, %v1881
        %v2062 = vadd.f32 %v1957, %v1882
        %v2063 = vadd.f32 %v1961, %v1883
        %v2064 = vadd.f32 %v1961, %v1884
        %v2065 = vadd.f32 %v1965, %v1885
        %v2066 = vadd.f32 %v1965, %v1886
        %v2067 = vadd.f32 %v1969, %v1887
        %v2068 = vadd.f32 %v1969, %v1888
        %v2069 = vadd.f32 %v1973, %v1889
        %v2070 = vadd.f32 %v1973, %v1890
        %v2071 = vadd.f32 %v1977, %v1891
        %v2072 = vadd.f32 %v1977, %v1892
        %v2073 = vadd.f32 %v1981, %v1893
        %v2074 = vadd.f32 %v1981, %v1894
        %v2075 = vadd.f32 %v1985, %v1895
        %v2076 = vadd.f32 %v1985, %v1896
        %v2077 = vadd.f32 %v1989, %v1897
        %v2078 = vadd.f32 %v1989, %v1898
        %v2079 = vadd.f32 %v1993, %v1899
        %v2080 = vadd.f32 %v1993, %v1900
        %v2081 = vadd.f32 %v1997, %v1901
        %v2082 = vadd.f32 %v1997, %v1902
        %v2083 = vadd.f32 %v2001, %v1903
        %v2084 = vadd.f32 %v2001, %v1904
        %v2085 = vadd.f32 %v2005, %v1905
        %v2086 = vadd.f32 %v2005, %v1906
        %v2087 = vadd.f32 %v2009, %v1907
        %v2088 = vadd.f32 %v2009, %v1908
        %v2089 = vadd.f32 %v2013, %v1909
        %v2090 = vadd.f32 %v2013, %v1910
        %v2091 = vadd.f32 %v2017, %v1911
        %v2092 = vadd.f32 %v2017, %v1912
        %v2093 = vadd.f32 %v2021, %v1913
        %v2094 = vadd.f32 %v2021, %v1914
        %v2095 = vadd.f32 %v2025, %v1915
        %v2096 = vadd.f32 %v2025, %v1916
        %v2097 = vadd.f32 %v2029, %v1917
        %v2098 = vadd.f32 %v2029, %v1918
        %v2099 = vadd.f32 %v2033, %v1919
        %v2100 = vadd.f32 %v2033, %v1920
        %v2101 = vadd.f32 %v2037, %v1921
        %v2102 = vadd.f32 %v2037, %v1922
        %v2103 = vadd.f32 %v2041, %v1923
        %v2104 = vadd.f32 %v2041, %v1924
        %v2105 = vadd.f32 %v2045, %v1925
        %v2106 = vadd.f32 %v2045, %v1926
        %v2107 = vadd.f32 %v2047, %v1148
        %v2108 = vadd.f32 %v2048, %v1150
        %v2109 = vadd.f32 %v2049, %v1152
        %v2110 = vadd.f32 %v2050, %v1154
        %v2111 = vadd.f32 %v2051, %v1156
        %v2112 = vadd.f32 %v2052, %v1158
        %v2113 = vadd.f32 %v2053, %v1160
        %v2114 = vadd.f32 %v2054, %v1162
        %v2115 = vadd.f32 %v2055, %v1164
        %v2116 = vadd.f32 %v2056, %v1166
        %v2117 = vadd.f32 %v2057, %v1168
        %v2118 = vadd.f32 %v2058, %v1170
        %v2119 = vadd.f32 %v2059, %v1172
        %v2120 = vadd.f32 %v2060, %v1174
        %v2121 = vadd.f32 %v2061, %v1176
        %v2122 = vadd.f32 %v2062, %v1178
        %v2123 = vadd.f32 %v2063, %v1180
        %v2124 = vadd.f32 %v2064, %v1182
        %v2125 = vadd.f32 %v2065, %v1184
        %v2126 = vadd.f32 %v2066, %v1186
        %v2127 = vadd.f32 %v2067, %v1188
        %v2128 = vadd.f32 %v2068, %v1190
        %v2129 = vadd.f32 %v2069, %v1192
        %v2130 = vadd.f32 %v2070, %v1194
        %v2131 = vadd.f32 %v2071, %v1196
        %v2132 = vadd.f32 %v2072, %v1198
        %v2133 = vadd.f32 %v2073, %v1200
        %v2134 = vadd.f32 %v2074, %v1202
        %v2135 = vadd.f32 %v2075, %v1204
        %v2136 = vadd.f32 %v2076, %v1206
        %v2137 = vadd.f32 %v2077, %v1208
        %v2138 = vadd.f32 %v2078, %v1210
        %v2139 = vadd.f32 %v2079, %v1212
        %v2140 = vadd.f32 %v2080, %v1214
        %v2141 = vadd.f32 %v2081, %v1216
        %v2142 = vadd.f32 %v2082, %v1218
        %v2143 = vadd.f32 %v2083, %v1220
        %v2144 = vadd.f32 %v2084, %v1222
        %v2145 = vadd.f32 %v2085, %v1224
        %v2146 = vadd.f32 %v2086, %v1226
        %v2147 = vadd.f32 %v2087, %v1228
        %v2148 = vadd.f32 %v2088, %v1230
        %v2149 = vadd.f32 %v2089, %v1232
        %v2150 = vadd.f32 %v2090, %v1234
        %v2151 = vadd.f32 %v2091, %v1236
        %v2152 = vadd.f32 %v2092, %v1238
        %v2153 = vadd.f32 %v2093, %v1240
        %v2154 = vadd.f32 %v2094, %v1242
        %v2155 = vadd.f32 %v2095, %v1244
        %v2156 = vadd.f32 %v2096, %v1246
        %v2157 = vadd.f32 %v2097, %v1248
        %v2158 = vadd.f32 %v2098, %v1250
        %v2159 = vadd.f32 %v2099, %v1252
        %v2160 = vadd.f32 %v2100, %v1254
        %v2161 = vadd.f32 %v2101, %v1256
        %v2162 = vadd.f32 %v2102, %v1258
        %v2163 = vadd.f32 %v2103, %v1260
        %v2164 = vadd.f32 %v2104, %v1262
        %v2165 = vadd.f32 %v2105, %v1264
        %v2166 = vadd.f32 %v2106, %v1266
        %v2167 = vadd.f32 %v2107, %v1628
        %v2168 = vadd.f32 %v2108, %v1630
        %v2169 = vadd.f32 %v2109, %v1632
        %v2170 = vadd.f32 %v2110, %v1634
        %v2171 = vadd.f32 %v2111, %v1636
        %v2172 = vadd.f32 %v2112, %v1638
        %v2173 = vadd.f32 %v2113, %v1640
        %v2174 = vadd.f32 %v2114, %v1642
        %v2175 = vadd.f32 %v2115, %v1644
        %v2176 = vadd.f32 %v2116, %v1646
        %v2177 = vadd.f32 %v2117, %v1648
        %v2178 = vadd.f32 %v2118, %v1650
        %v2179 = vadd.f32 %v2119, %v1652
        %v2180 = vadd.f32 %v2120, %v1654
        %v2181 = vadd.f32 %v2121, %v1656
        %v2182 = vadd.f32 %v2122, %v1658
        %v2183 = vadd.f32 %v2123, %v1660
        %v2184 = vadd.f32 %v2124, %v1662
        %v2185 = vadd.f32 %v2125, %v1664
        %v2186 = vadd.f32 %v2126, %v1666
        %v2187 = vadd.f32 %v2127, %v1668
        %v2188 = vadd.f32 %v2128, %v1670
        %v2189 = vadd.f32 %v2129, %v1672
        %v2190 = vadd.f32 %v2130, %v1674
        %v2191 = vadd.f32 %v2131, %v1676
        %v2192 = vadd.f32 %v2132, %v1678
        %v2193 = vadd.f32 %v2133, %v1680
        %v2194 = vadd.f32 %v2134, %v1682
        %v2195 = vadd.f32 %v2135, %v1684
        %v2196 = vadd.f32 %v2136, %v1686
        %v2197 = vadd.f32 %v2137, %v1688
        %v2198 = vadd.f32 %v2138, %v1690
        %v2199 = vadd.f32 %v2139, %v1692
        %v2200 = vadd.f32 %v2140, %v1694
        %v2201 = vadd.f32 %v2141, %v1696
        %v2202 = vadd.f32 %v2142, %v1698
        %v2203 = vadd.f32 %v2143, %v1700
        %v2204 = vadd.f32 %v2144, %v1702
        %v2205 = vadd.f32 %v2145, %v1704
        %v2206 = vadd.f32 %v2146, %v1706
        %v2207 = vadd.f32 %v2147, %v1708
        %v2208 = vadd.f32 %v2148, %v1710
        %v2209 = vadd.f32 %v2149, %v1712
        %v2210 = vadd.f32 %v2150, %v1714
        %v2211 = vadd.f32 %v2151, %v1716
        %v2212 = vadd.f32 %v2152, %v1718
        %v2213 = vadd.f32 %v2153, %v1720
        %v2214 = vadd.f32 %v2154, %v1722
        %v2215 = vadd.f32 %v2155, %v1724
        %v2216 = vadd.f32 %v2156, %v1726
        %v2217 = vadd.f32 %v2157, %v1728
        %v2218 = vadd.f32 %v2158, %v1730
        %v2219 = vadd.f32 %v2159, %v1732
        %v2220 = vadd.f32 %v2160, %v1734
        %v2221 = vadd.f32 %v2161, %v1736
        %v2222 = vadd.f32 %v2162, %v1738
        %v2223 = vadd.f32 %v2163, %v1740
        %v2224 = vadd.f32 %v2164, %v1742
        %v2225 = vadd.f32 %v2165, %v1744
        %v2226 = vadd.f32 %v2166, %v1746
        %2227 = vst [vmem:[%s137] sm:$0xff] %v2167
        %2228 = vst [vmem:[%s137 + $0x8] sm:$0xff] %v2168
        %2229 = vst [vmem:[%s137 + $0x10] sm:$0xff] %v2169
        %2230 = vst [vmem:[%s137 + $0x18] sm:$0xff] %v2170
        %2231 = vst [vmem:[%s137 + $0x20] sm:$0xff] %v2171
        %2232 = vst [vmem:[%s137 + $0x28] sm:$0xff] %v2172
        %2233 = vst [vmem:[%s137 + $0x30] sm:$0xff] %v2173
        %2234 = vst [vmem:[%s137 + $0x38] sm:$0xff] %v2174
        %2235 = vst [vmem:[%s137 + $0x40] sm:$0xff] %v2175
        %2236 = vst [vmem:[%s137 + $0x48] sm:$0xff] %v2176
        %2237 = vst [vmem:[%s137 + $0x50] sm:$0xff] %v2177
        %2238 = vst [vmem:[%s137 + $0x58] sm:$0xff] %v2178
        %2239 = vst [vmem:[%s137 + $0x60] sm:$0xff] %v2179
        %2240 = vst [vmem:[%s137 + $0x68] sm:$0xff] %v2180
        %2241 = vst [vmem:[%s137 + $0x70] sm:$0xff] %v2181
        %2242 = vst [vmem:[%s137 + $0x78] sm:$0xff] %v2182
        %2243 = vst [vmem:[%s137 + $0x80] sm:$0xff] %v2183
        %2244 = vst [vmem:[%s137 + $0x88] sm:$0xff] %v2184
        %2245 = vst [vmem:[%s137 + $0x90] sm:$0xff] %v2185
        %2246 = vst [vmem:[%s137 + $0x98] sm:$0xff] %v2186
        %2247 = vst [vmem:[%s137 + $0xa0] sm:$0xff] %v2187
        %2248 = vst [vmem:[%s137 + $0xa8] sm:$0xff] %v2188
        %2249 = vst [vmem:[%s137 + $0xb0] sm:$0xff] %v2189
        %2250 = vst [vmem:[%s137 + $0xb8] sm:$0xff] %v2190
        %2251 = vst [vmem:[%s137 + $0xc0] sm:$0xff] %v2191
        %2252 = vst [vmem:[%s137 + $0xc8] sm:$0xff] %v2192
        %2253 = vst [vmem:[%s137 + $0xd0] sm:$0xff] %v2193
        %2254 = vst [vmem:[%s137 + $0xd8] sm:$0xff] %v2194
        %2255 = vst [vmem:[%s137 + $0xe0] sm:$0xff] %v2195
        %2256 = vst [vmem:[%s137 + $0xe8] sm:$0xff] %v2196
        %2257 = vst [vmem:[%s137 + $0xf0] sm:$0xff] %v2197
        %2258 = vst [vmem:[%s137 + $0xf8] sm:$0xff] %v2198
        %2259 = vst [vmem:[%s137 + $0x100] sm:$0xff] %v2199
        %2260 = vst [vmem:[%s137 + $0x108] sm:$0xff] %v2200
        %2261 = vst [vmem:[%s137 + $0x110] sm:$0xff] %v2201
        %2262 = vst [vmem:[%s137 + $0x118] sm:$0xff] %v2202
        %2263 = vst [vmem:[%s137 + $0x120] sm:$0xff] %v2203
        %2264 = vst [vmem:[%s137 + $0x128] sm:$0xff] %v2204
        %2265 = vst [vmem:[%s137 + $0x130] sm:$0xff] %v2205
        %2266 = vst [vmem:[%s137 + $0x138] sm:$0xff] %v2206
        %2267 = vst [vmem:[%s137 + $0x140] sm:$0xff] %v2207
        %2268 = vst [vmem:[%s137 + $0x148] sm:$0xff] %v2208
        %2269 = vst [vmem:[%s137 + $0x150] sm:$0xff] %v2209
        %2270 = vst [vmem:[%s137 + $0x158] sm:$0xff] %v2210
        %2271 = vst [vmem:[%s137 + $0x160] sm:$0xff] %v2211
        %2272 = vst [vmem:[%s137 + $0x168] sm:$0xff] %v2212
        %2273 = vst [vmem:[%s137 + $0x170] sm:$0xff] %v2213
        %2274 = vst [vmem:[%s137 + $0x178] sm:$0xff] %v2214
        %2275 = vst [vmem:[%s137 + $0x180] sm:$0xff] %v2215
        %2276 = vst [vmem:[%s137 + $0x188] sm:$0xff] %v2216
        %2277 = vst [vmem:[%s137 + $0x190] sm:$0xff] %v2217
        %2278 = vst [vmem:[%s137 + $0x198] sm:$0xff] %v2218
        %2279 = vst [vmem:[%s137 + $0x1a0] sm:$0xff] %v2219
        %2280 = vst [vmem:[%s137 + $0x1a8] sm:$0xff] %v2220
        %2281 = vst [vmem:[%s137 + $0x1b0] sm:$0xff] %v2221
        %2282 = vst [vmem:[%s137 + $0x1b8] sm:$0xff] %v2222
        %2283 = vst [vmem:[%s137 + $0x1c0] sm:$0xff] %v2223
        %2284 = vst [vmem:[%s137 + $0x1c8] sm:$0xff] %v2224
        %2285 = vst [vmem:[%s137 + $0x1d0] sm:$0xff] %v2225
        %2286 = vst [vmem:[%s137 + $0x1d8] sm:$0xff] %v2226
        %s2287 = sand.u32 %s71, 1
        %s2288 = scalar_lea.sflag [#allocation3], %s2287
        %s2289 = sand.u32 %s71, 1
        %s2290 = smul.addr %s2289, 480
        %s2291 = scalar_lea.vmem [#allocation2], %s2290
        // Predicated region
        $region29: #{tpu_custom_call.1} parent=27 // pred_check
          %p2292 = pneg %p81
        $region30: #{tpu_custom_call.1} parent=27 // pred_check_branch
          %2294 = sbr.rel (%p2292) target = $region32
        $region31: #{tpu_custom_call.1} parent=27 // pred_region
          %s2295 = smul.u32 30, %s16
          %s2297 = ssub.s32 7680, 7680
          %2298 = vsyncadd %s2288, %s2297
          %s2299 = smul.addr %s2295, 2
          %s2300 = smul.addr %s2299, 128
          %s2301 = scalar_lea.hbm %s2, %s2300
          %s2302 = sshll.u32 %s2291, 4
          %s2303 = int_to_ptr.vmem [resolvable:$true] %s2302
          %2308 = dma.vmem_to_hbm [thread:$0]  %s2303, 7680, %s2301, %s2288, 256, 256, 16
        $region32: #{tpu_custom_call.1} parent=27 // pred_fallthru
          _
      $region28: #{tpu_custom_call.1} parent=5 // pred_fallthru
        _
      %p2309 = scmp.le.s32.totalorder 2, %s11
      // Predicated region
      $region33: #{tpu_custom_call.1} parent=5 // pred_check
        %p2310 = pneg %p2309
      $region34: #{tpu_custom_call.1} parent=5 // pred_check_branch
        %2312 = sbr.rel (%p2310) target = $region36
      $region35: #{tpu_custom_call.1} parent=5 // pred_region
        %s2313 = ssub.s32 %s11, 2
        // Predicated region
        $region37: #{tpu_custom_call.1} parent=35 // pred_check
          %p2314 = pneg %p87
        $region38: #{tpu_custom_call.1} parent=35 // pred_check_branch
          %2316 = sbr.rel (%p2314) target = $region40
        $region39: #{tpu_custom_call.1} parent=35 // pred_region
          %s2317 = sand.u32 %s72, 1
          %s2318 = scalar_lea.sflag [#allocation3], %s2317
          %s2319 = sand.u32 %s72, 1
          %s2320 = smul.addr %s2319, 480
          %s2321 = scalar_lea.vmem [#allocation2], %s2320
          %2322 = dma.done %s2318, 7680
        $region40: #{tpu_custom_call.1} parent=35 // pred_fallthru
          _
      $region36: #{tpu_custom_call.1} parent=5 // pred_fallthru
        _
    $region6: #{tpu_custom_call.1} parent=1 // loop_footer
      %s15 = sadd.s32 1, %s11
    $region7: #{tpu_custom_call.1} parent=1 // loop_footer_branch
      %10 = sbr.rel target = $region3
    $region8: #{tpu_custom_call.1} parent=1 // loop_exit
      _
    %2323 = vsyncpa [#allocation3], 1
    %s2324 = scalar_lea.sflag [#allocation3], 1
    %2325 = vsyncpa %s2324, 1

</llo_original>
